<compile_context>
chip_gen: v7x
topology: tpu7x:2x2x1
jax: 0.10.0
libtpu: 0.0.40
codegen_flags: <defaults>
</compile_context>

<pallas_src>
import jax
import jax.numpy as jnp
from jax import lax
from jax.experimental import pallas as pl
from jax.experimental.pallas import tpu as pltpu

# TODO(synk): AutoModel.from_pretrained BERT encoder has no clean Pallas
# equivalent; synthetic `last_hidden_states` tensors stand in for its output.

ERROR_MARGIN = 1.0   # config.error_margin
THRESHOLD = 0.5      # config.threshold


# ---------------------------------------------------------------------------
# Fused kernel: premise masked-mean pooling (accumulated over the P grid axis)
# + hypothesis pooling + order-embedding penalty.
# Grid = (batch_tiles, P // Pt); the premise axis is the reduction ("arbitrary")
# axis with a VMEM accumulator.
# ---------------------------------------------------------------------------
def _pool_order_kernel(hid1_ref, mask1_ref, hid2_ref, mask2_ref, e_ref, acc_ref):
    p = pl.program_id(1)
    n_p_steps = pl.num_programs(1)
    pt = hid1_ref.shape[1]          # premises per grid step (static)

    @pl.when(p == 0)
    def _init():
        acc_ref[...] = jnp.zeros_like(acc_ref)

    # Premise masked mean over S.  The masked token-sum is a batched
    # [1,S]x[S,H] MXU contraction with f32 accumulation — no mask[...,None]
    # broadcast and no f32 copy of the hidden-state tile.  HIGHEST precision:
    # for f32 encoders it keeps full accuracy; the extra MXU passes are hidden
    # under DMA (kernel is memory-bound); for bf16 encoders it is the normal
    # single-pass matmul.
    h1_all = hid1_ref[...]           # (Bt, Pt, S, H)  encoder-native dtype
    m1_all = mask1_ref[...]          # (Bt, Pt, 1, S)  same dtype
    for j in range(pt):              # pt is static and tiny (1..4)
        h1 = h1_all[:, j]            # (Bt, S, H)
        m1 = m1_all[:, j]            # (Bt, 1, S)
        sum_emb = jnp.einsum("bms,bsh->bmh", m1, h1,
                             preferred_element_type=jnp.float32,
                             precision=lax.Precision.HIGHEST)      # (Bt,1,H)
        sum_mask = jnp.maximum(
            jnp.sum(m1.astype(jnp.float32), axis=-1, keepdims=True), 1e-9)
        acc_ref[...] += sum_emb / sum_mask   # running sum of pooled premises

    @pl.when(p == n_p_steps - 1)
    def _finish():
        # sent_pooling='mean' over all P = n_p_steps * pt premises.
        emb1 = acc_ref[...] * (1.0 / (n_p_steps * pt))             # (Bt,1,H)

        # Hypothesis, emb_pooling='mean'.  NOTE: the torch reference sums the
        # *unmasked* hidden states and divides by the mask sum (no clamp) —
        # reproduced faithfully.  Ones-row MXU contraction instead of an f32
        # materialization of the whole tile.
        h2 = hid2_ref[...]                                          # (Bt,S,H)
        ones_row = jnp.ones(mask2_ref.shape, dtype=h2.dtype)        # (Bt,1,S)
        sum_h2 = jnp.einsum("bms,bsh->bmh", ones_row, h2,
                            preferred_element_type=jnp.float32,
                            precision=lax.Precision.HIGHEST)        # (Bt,1,H)
        denom = jnp.sum(mask2_ref[...].astype(jnp.float32),
                        axis=-1, keepdims=True)                     # (Bt,1,1)
        emb2 = sum_h2 / denom

        # calc_penalty_pos: sum_j max(emb1 - emb2, 0)^2
        d = jnp.maximum(emb1 - emb2, 0.0)
        e_ref[...] = jnp.sum(d * d, axis=-1, keepdims=True)         # (Bt,1,1)


# ---------------------------------------------------------------------------
# Wrapper
# ---------------------------------------------------------------------------
def _largest_divisor_leq(n, cap):
    cap = max(1, min(n, cap))
    for d in range(cap, 0, -1):
        if n % d == 0:
            return d
    return 1


def _pick_batch_tile(B, batch_tile):
    # Largest divisor of B <= batch_tile, preferring >= 2 batch grid steps so
    # the "parallel" axis feeds both TensorCores on v7x.  (Divisor => no
    # jnp.pad copy of the largest tensor.)
    bt = _largest_divisor_leq(B, batch_tile)
    if B > 1 and B // bt < 2:
        bt = _largest_divisor_leq(B, max(1, B // 2))
    return bt


def _default_vmem_limit_bytes():
    # v5e/v6e have 128 MiB physical VMEM -> raise the scoped limit for bigger
    # resident blocks; v7x has only 64 MiB -> stay well under it.
    try:
        kind = jax.devices()[0].device_kind.lower()
    except Exception:
        kind = ""
    if "v5" in kind or "v6" in kind:
        return 96 * 1024 * 1024
    return 48 * 1024 * 1024


def _build_pooling_call(B, P, S, H, Bt, Pt, vmem_limit_bytes,
                        single_buffer_hypothesis):
    # hid2/mask2 only change on the batch axis and are consumed once per P
    # sweep -> single-buffer them to reclaim resident VMEM.
    hyp_kwargs = ({"pipeline_mode": pl.Buffered(1)}
                  if single_buffer_hypothesis else {})
    return pl.pallas_call(
        _pool_order_kernel,
        grid=(B // Bt, P // Pt),
        in_specs=[
            pl.BlockSpec((Bt, Pt, S, H), lambda b, p: (b, p, 0, 0)),   # hid1
            pl.BlockSpec((Bt, Pt, 1, S), lambda b, p: (b, p, 0, 0)),   # mask1
            pl.BlockSpec((Bt, S, H), lambda b, p: (b, 0, 0), **hyp_kwargs),
            pl.BlockSpec((Bt, 1, S), lambda b, p: (b, 0, 0), **hyp_kwargs),
        ],
        out_specs=pl.BlockSpec((Bt, 1, 1), lambda b, p: (b, 0, 0)),    # e
        out_shape=jax.ShapeDtypeStruct((B, 1, 1), jnp.float32),
        scratch_shapes=[pltpu.VMEM((Bt, 1, H), jnp.float32)],
        compiler_params=pltpu.CompilerParams(
            dimension_semantics=("parallel", "arbitrary"),
            vmem_limit_bytes=vmem_limit_bytes,
        ),
    )


def pooled_order_penalty(hid1, mask1, hid2, mask2, *,
                         batch_tile=8, premise_tile=1,
                         vmem_limit_bytes=None,
                         single_buffer_hypothesis=True):
    """Per-example order-embedding penalty e, shape (B,).

    Dtype-polymorphic: consumes the encoder's native dtype (no standalone
    astype of the big activations — that would add a full HBM read+write).
    At real BERT shapes, raise batch_tile (v5e/v6e) or premise_tile (v7x) to
    grow per-step work; defaults are safe everywhere.
    """
    B, P, S, H = hid1.shape
    Bt = _pick_batch_tile(B, batch_tile)
    Pt = _largest_divisor_leq(P, premise_tile)
    if vmem_limit_bytes is None:
        vmem_limit_bytes = _default_vmem_limit_bytes()

    # Masks are tiny; cast them to the activation dtype so the MXU contraction
    # stays in the encoder's dtype (avoids an implicit f32 promotion of hid).
    mask1 = mask1.astype(hid1.dtype).reshape(B, P, 1, S)
    mask2 = mask2.astype(hid2.dtype).reshape(B, 1, S)
    args = (hid1, mask1, hid2, mask2)

    if single_buffer_hypothesis:
        try:
            e = _build_pooling_call(B, P, S, H, Bt, Pt, vmem_limit_bytes,
                                    single_buffer_hypothesis=True)(*args)
            return e[:, 0, 0]
        except Exception:
            # pipeline_mode=pl.Buffered(1) is not supported on every
            # jax/Mosaic version; fall back to default double-buffering.
            pass
    e = _build_pooling_call(B, P, S, H, Bt, Pt, vmem_limit_bytes,
                            single_buffer_hypothesis=False)(*args)
    return e[:, 0, 0]


def bert_order_emb_forward(hid1, mask1, hid2, mask2, labels, **kwargs):
    """Forward pass given (synthetic) BERT last_hidden_states."""
    e = pooled_order_penalty(hid1, mask1, hid2, mask2, **kwargs)
    # en_loss / preds epilogue: O(B) scalar work in plain JAX (pooled
    # embeddings never leave VMEM; no second pallas_call).
    labels = jnp.asarray(labels, jnp.float32)
    err_pos = jnp.sum(e * labels)
    err_neg = jnp.sum(jnp.maximum(ERROR_MARGIN - e, 0.0) * jnp.abs(1.0 - labels))
    preds = (e <= THRESHOLD).astype(jnp.float32)
    return err_pos + err_neg, preds


# ---------------------------------------------------------------------------
# Pure-JAX reference (mirrors the torch module math)
# ---------------------------------------------------------------------------
def _reference(hid1, mask1, hid2, mask2, labels):
    f32 = jnp.float32
    h1 = hid1.astype(f32)
    m1 = mask1.astype(f32)
    sum_emb = jnp.sum(h1 * m1[..., None], axis=2)                     # (B,P,H)
    sum_mask = jnp.maximum(jnp.sum(m1, axis=2)[..., None], 1e-9)
    emb1 = jnp.mean(sum_emb / sum_mask, axis=1)                       # (B,H)
    emb2 = (jnp.sum(hid2.astype(f32), axis=1)
            / jnp.sum(mask2.astype(f32), axis=1, keepdims=True))      # (B,H)
    d = jnp.maximum(emb1 - emb2, 0.0)
    e = jnp.sum(d * d, axis=1)
    err_pos = jnp.sum(e * labels)
    err_neg = jnp.sum(jnp.maximum(ERROR_MARGIN - e, 0.0) * jnp.abs(1.0 - labels))
    preds = (e <= THRESHOLD).astype(f32)
    return err_pos + err_neg, preds, e


if __name__ == "__main__":
    B, P, S, H = 2, 3, 8, 32   # batch, premises-per-example, seq, hidden

    key = jax.random.PRNGKey(0)
    k1, k2 = jax.random.split(key, 2)

    # Synthetic encoder outputs (stand-ins for BERT last_hidden_states),
    # consumed in their native dtype (f32 here).
    hid1 = jax.random.normal(k1, (B, P, S, H), dtype=jnp.float32)
    hid2 = jax.random.normal(k2, (B, S, H), dtype=jnp.float32)

    # Attention masks: first few tokens valid, rest padding.
    pos = jnp.arange(S)
    mask1 = (pos[None, None, :] < jnp.array([[5, 6, 4], [7, 3, 8]])[..., None]
             ).astype(jnp.float32)                                     # (B,P,S)
    mask2 = (pos[None, :] < jnp.array([[6], [5]])).astype(jnp.float32)  # (B,S)

    labels = jnp.array([1.0, 0.0], dtype=jnp.float32)

    loss, preds = bert_order_emb_forward(hid1, mask1, hid2, mask2, labels)
    jax.block_until_ready((loss, preds))

    ref_loss, ref_preds, ref_e = _reference(hid1, mask1, hid2, mask2, labels)

    assert jnp.allclose(loss, ref_loss, rtol=1e-4, atol=1e-4), (loss, ref_loss)
    # preds may only legitimately differ when the penalty sits exactly on the
    # threshold; require equality away from it.
    near_thr = jnp.abs(ref_e - THRESHOLD) < 1e-3
    assert bool(jnp.all((preds == ref_preds) | near_thr)), (preds, ref_preds, ref_e)

    print("KERNEL_OK")
</pallas_src>

<mosaic_0001>
module attributes {stable_mosaic.version = 11 : i64} {
  func.func @_pool_order_kernel(%arg0: i32, %arg1: i32, %arg2: memref<1x1x8x32xf32, #tpu.memory_space<vmem>>, %arg3: memref<1x1x1x8xf32, #tpu.memory_space<vmem>>, %arg4: memref<1x8x32xf32, #tpu.memory_space<vmem>>, %arg5: memref<1x1x8xf32, #tpu.memory_space<vmem>>, %arg6: memref<1x1x1xf32, #tpu.memory_space<vmem>>, %arg7: memref<1x1x32xf32, #tpu.memory_space<vmem>>) attributes {dimension_semantics = [#tpu.dimension_semantics<parallel>, #tpu.dimension_semantics<arbitrary>], iteration_bounds = array<i64: 2, 3>, scalar_prefetch = 0 : i64, scratch_operands = 1 : i64, tpu.core_type = #tpu.core_type<tc>, window_params = [{transform_indices = @transform_0, window_bounds = array<i64: 1, 1, 8, 32>}, {transform_indices = @transform_1, window_bounds = array<i64: 1, 1, 1, 8>}, {pipeline_mode = #tpu.pipeline_mode<synchronous>, transform_indices = @transform_2, window_bounds = array<i64: 1, 8, 32>}, {pipeline_mode = #tpu.pipeline_mode<synchronous>, transform_indices = @transform_3, window_bounds = array<i64: 1, 1, 8>}, {transform_indices = @transform_4, window_bounds = array<i64: 1, 1, 1>}]} {
    %c0_i32 = arith.constant 0 : i32
    %0 = arith.cmpi eq, %arg1, %c0_i32 : i32
    %1 = arith.extui %0 : i1 to i32
    %c0_i32_0 = arith.constant 0 : i32
    %2 = arith.cmpi ne, %1, %c0_i32_0 : i32
    scf.if %2 {
      %cst_17 = arith.constant 0.000000e+00 : f32
      %20 = vector.broadcast %cst_17 : f32 to vector<1x1x32xf32>
      %c0_18 = arith.constant 0 : index
      %c0_19 = arith.constant 0 : index
      %c0_20 = arith.constant 0 : index
      %21 = vector.load %arg7[%c0_18, %c0_19, %c0_20] : memref<1x1x32xf32, #tpu.memory_space<vmem>>, vector<1x1x32xf32>
      tpu.vector_store %arg7[%c0_18, %c0_19, %c0_20], %20 {strides = array<i32>} : memref<1x1x32xf32, #tpu.memory_space<vmem>>, vector<1x1x32xf32>,
    } else {
    }
    %c0 = arith.constant 0 : index
    %c0_1 = arith.constant 0 : index
    %c0_2 = arith.constant 0 : index
    %c0_3 = arith.constant 0 : index
    %3 = vector.load %arg2[%c0, %c0_1, %c0_2, %c0_3] : memref<1x1x8x32xf32, #tpu.memory_space<vmem>>, vector<1x1x8x32xf32>
    %c0_4 = arith.constant 0 : index
    %c0_5 = arith.constant 0 : index
    %c0_6 = arith.constant 0 : index
    %c0_7 = arith.constant 0 : index
    %4 = vector.load %arg3[%c0_4, %c0_5, %c0_6, %c0_7] : memref<1x1x1x8xf32, #tpu.memory_space<vmem>>, vector<1x1x1x8xf32>
    %5 = vector.shape_cast %3 : vector<1x1x8x32xf32> to vector<1x8x32xf32>
    %6 = vector.shape_cast %4 : vector<1x1x1x8xf32> to vector<1x1x8xf32>
    "tpu.trace_start"() <{level = 10 : i32, message = "bms,bsh->bmh"}> : () -> ()
    %cst = arith.constant dense<0.000000e+00> : vector<1x1x32xf32>
    %7 = tpu.matmul %6, %5, %cst {dimension_numbers = #tpu.dot_dimension_numbers<[2], [1], [1], [2], [0, 0, 0, 1, 1, 2], [0], [0]>, precision = #tpu.contract_precision<fp32>} : vector<1x1x8xf32>, vector<1x8x32xf32>, vector<1x1x32xf32> -> vector<1x1x32xf32>
    "tpu.trace_stop"() : () -> ()
    %cst_8 = arith.constant dense<0.000000e+00> : vector<1x1xf32>
    %8 = vector.multi_reduction <add>, %6, %cst_8 [2] : vector<1x1x8xf32> to vector<1x1xf32>
    %9 = vector.shape_cast %8 : vector<1x1xf32> to vector<1x1x1xf32>
    %cst_9 = arith.constant 9.99999971E-10 : f32
    %10 = vector.broadcast %cst_9 : f32 to vector<1x1x1xf32>
    %11 = arith.maximumf %9, %10 : vector<1x1x1xf32>
    %c0_10 = arith.constant 0 : index
    %c0_11 = arith.constant 0 : index
    %c0_12 = arith.constant 0 : index
    %12 = vector.load %arg7[%c0_10, %c0_11, %c0_12] : memref<1x1x32xf32, #tpu.memory_space<vmem>>, vector<1x1x32xf32>
    %13 = vector.broadcast %11 : vector<1x1x1xf32> to vector<1x1x32xf32>
    %14 = arith.divf %7, %13 : vector<1x1x32xf32>
    %15 = arith.addf %12, %14 : vector<1x1x32xf32>
    %c0_13 = arith.constant 0 : index
    %c0_14 = arith.constant 0 : index
    %c0_15 = arith.constant 0 : index
    %16 = vector.load %arg7[%c0_13, %c0_14, %c0_15] : memref<1x1x32xf32, #tpu.memory_space<vmem>>, vector<1x1x32xf32>
    tpu.vector_store %arg7[%c0_13, %c0_14, %c0_15], %15 {strides = array<i32>} : memref<1x1x32xf32, #tpu.memory_space<vmem>>, vector<1x1x32xf32>,
    %c2_i32 = arith.constant 2 : i32
    %17 = arith.cmpi eq, %arg1, %c2_i32 : i32
    %18 = arith.extui %17 : i1 to i32
    %c0_i32_16 = arith.constant 0 : i32
    %19 = arith.cmpi ne, %18, %c0_i32_16 : i32
    scf.if %19 {
      %c0_17 = arith.constant 0 : index
      %c0_18 = arith.constant 0 : index
      %c0_19 = arith.constant 0 : index
      %20 = vector.load %arg7[%c0_17, %c0_18, %c0_19] : memref<1x1x32xf32, #tpu.memory_space<vmem>>, vector<1x1x32xf32>
      %cst_20 = arith.constant 0.333333343 : f32
      %21 = vector.broadcast %cst_20 : f32 to vector<1x1x32xf32>
      %22 = arith.mulf %20, %21 : vector<1x1x32xf32>
      %c0_21 = arith.constant 0 : index
      %c0_22 = arith.constant 0 : index
      %c0_23 = arith.constant 0 : index
      %23 = vector.load %arg4[%c0_21, %c0_22, %c0_23] : memref<1x8x32xf32, #tpu.memory_space<vmem>>, vector<1x8x32xf32>
      %cst_24 = arith.constant 1.000000e+00 : f32
      %24 = vector.broadcast %cst_24 : f32 to vector<1x1x8xf32>
      "tpu.trace_start"() <{level = 10 : i32, message = "bms,bsh->bmh"}> : () -> ()
      %cst_25 = arith.constant dense<0.000000e+00> : vector<1x1x32xf32>
      %25 = tpu.matmul %24, %23, %cst_25 {dimension_numbers = #tpu.dot_dimension_numbers<[2], [1], [1], [2], [0, 0, 0, 1, 1, 2], [0], [0]>, precision = #tpu.contract_precision<fp32>} : vector<1x1x8xf32>, vector<1x8x32xf32>, vector<1x1x32xf32> -> vector<1x1x32xf32>
      "tpu.trace_stop"() : () -> ()
      %c0_26 = arith.constant 0 : index
      %c0_27 = arith.constant 0 : index
      %c0_28 = arith.constant 0 : index
      %26 = vector.load %arg5[%c0_26, %c0_27, %c0_28] : memref<1x1x8xf32, #tpu.memory_space<vmem>>, vector<1x1x8xf32>
      %cst_29 = arith.constant dense<0.000000e+00> : vector<1x1xf32>
      %27 = vector.multi_reduction <add>, %26, %cst_29 [2] : vector<1x1x8xf32> to vector<1x1xf32>
      %28 = vector.shape_cast %27 : vector<1x1xf32> to vector<1x1x1xf32>
      %29 = vector.broadcast %28 : vector<1x1x1xf32> to vector<1x1x32xf32>
      %30 = arith.divf %25, %29 : vector<1x1x32xf32>
      %31 = arith.subf %22, %30 : vector<1x1x32xf32>
      %cst_30 = arith.constant 0.000000e+00 : f32
      %32 = vector.broadcast %cst_30 : f32 to vector<1x1x32xf32>
      %33 = arith.maximumf %31, %32 : vector<1x1x32xf32>
      %34 = arith.mulf %33, %33 : vector<1x1x32xf32>
      %cst_31 = arith.constant dense<0.000000e+00> : vector<1x1xf32>
      %35 = vector.multi_reduction <add>, %34, %cst_31 [2] : vector<1x1x32xf32> to vector<1x1xf32>
      %36 = vector.shape_cast %35 : vector<1x1xf32> to vector<1x1x1xf32>
      %c0_32 = arith.constant 0 : index
      %c0_33 = arith.constant 0 : index
      %c0_34 = arith.constant 0 : index
      %37 = vector.load %arg6[%c0_32, %c0_33, %c0_34] : memref<1x1x1xf32, #tpu.memory_space<vmem>>, vector<1x1x1xf32>
      tpu.vector_store %arg6[%c0_32, %c0_33, %c0_34], %36 {strides = array<i32>} : memref<1x1x1xf32, #tpu.memory_space<vmem>>, vector<1x1x1xf32>,
    } else {
    }
    return
  }
  func.func @transform_0(%arg0: i32, %arg1: i32) -> (i32, i32, i32, i32) {
    %c0_i32 = arith.constant 0 : i32
    %c0_i32_0 = arith.constant 0 : i32
    %c0_i32_1 = arith.constant 0 : i32
    return %arg0, %arg1, %c0_i32, %c0_i32_0 : i32, i32, i32, i32
  }
  func.func @transform_1(%arg0: i32, %arg1: i32) -> (i32, i32, i32, i32) {
    %c0_i32 = arith.constant 0 : i32
    %c0_i32_0 = arith.constant 0 : i32
    %c0_i32_1 = arith.constant 0 : i32
    return %arg0, %arg1, %c0_i32, %c0_i32_0 : i32, i32, i32, i32
  }
  func.func @transform_2(%arg0: i32, %arg1: i32) -> (i32, i32, i32) {
    %c0_i32 = arith.constant 0 : i32
    %c0_i32_0 = arith.constant 0 : i32
    %c0_i32_1 = arith.constant 0 : i32
    return %arg0, %c0_i32, %c0_i32_0 : i32, i32, i32
  }
  func.func @transform_3(%arg0: i32, %arg1: i32) -> (i32, i32, i32) {
    %c0_i32 = arith.constant 0 : i32
    %c0_i32_0 = arith.constant 0 : i32
    %c0_i32_1 = arith.constant 0 : i32
    return %arg0, %c0_i32, %c0_i32_0 : i32, i32, i32
  }
  func.func @transform_4(%arg0: i32, %arg1: i32) -> (i32, i32, i32) {
    %c0_i32 = arith.constant 0 : i32
    %c0_i32_0 = arith.constant 0 : i32
    %c0_i32_1 = arith.constant 0 : i32
    return %arg0, %c0_i32, %c0_i32_0 : i32, i32, i32
  }
}

module attributes {stable_mosaic.version = 11 : i64} {
  func.func @_pool_order_kernel(%arg0: i32, %arg1: i32, %arg2: memref<1x1x8x32xf32, #tpu.memory_space<vmem>>, %arg3: memref<1x1x1x8xf32, #tpu.memory_space<vmem>>, %arg4: memref<1x8x32xf32, #tpu.memory_space<vmem>>, %arg5: memref<1x1x8xf32, #tpu.memory_space<vmem>>, %arg6: memref<1x1x1xf32, #tpu.memory_space<vmem>>, %arg7: memref<1x1x32xf32, #tpu.memory_space<vmem>>) attributes {dimension_semantics = [#tpu.dimension_semantics<parallel>, #tpu.dimension_semantics<arbitrary>], iteration_bounds = array<i64: 2, 3>, scalar_prefetch = 0 : i64, scratch_operands = 1 : i64, tpu.core_type = #tpu.core_type<tc>, window_params = [{transform_indices = @transform_0, window_bounds = array<i64: 1, 1, 8, 32>}, {transform_indices = @transform_1, window_bounds = array<i64: 1, 1, 1, 8>}, {transform_indices = @transform_2, window_bounds = array<i64: 1, 8, 32>}, {transform_indices = @transform_3, window_bounds = array<i64: 1, 1, 8>}, {transform_indices = @transform_4, window_bounds = array<i64: 1, 1, 1>}]} {
    %c0_i32 = arith.constant 0 : i32
    %0 = arith.cmpi eq, %arg1, %c0_i32 : i32
    %1 = arith.extui %0 : i1 to i32
    %c0_i32_0 = arith.constant 0 : i32
    %2 = arith.cmpi ne, %1, %c0_i32_0 : i32
    scf.if %2 {
      %cst_17 = arith.constant 0.000000e+00 : f32
      %20 = vector.broadcast %cst_17 : f32 to vector<1x1x32xf32>
      %c0_18 = arith.constant 0 : index
      %c0_19 = arith.constant 0 : index
      %c0_20 = arith.constant 0 : index
      %21 = vector.load %arg7[%c0_18, %c0_19, %c0_20] : memref<1x1x32xf32, #tpu.memory_space<vmem>>, vector<1x1x32xf32>
      tpu.vector_store %arg7[%c0_18, %c0_19, %c0_20], %20 {strides = array<i32>} : memref<1x1x32xf32, #tpu.memory_space<vmem>>, vector<1x1x32xf32>,
    } else {
    }
    %c0 = arith.constant 0 : index
    %c0_1 = arith.constant 0 : index
    %c0_2 = arith.constant 0 : index
    %c0_3 = arith.constant 0 : index
    %3 = vector.load %arg2[%c0, %c0_1, %c0_2, %c0_3] : memref<1x1x8x32xf32, #tpu.memory_space<vmem>>, vector<1x1x8x32xf32>
    %c0_4 = arith.constant 0 : index
    %c0_5 = arith.constant 0 : index
    %c0_6 = arith.constant 0 : index
    %c0_7 = arith.constant 0 : index
    %4 = vector.load %arg3[%c0_4, %c0_5, %c0_6, %c0_7] : memref<1x1x1x8xf32, #tpu.memory_space<vmem>>, vector<1x1x1x8xf32>
    %5 = vector.shape_cast %3 : vector<1x1x8x32xf32> to vector<1x8x32xf32>
    %6 = vector.shape_cast %4 : vector<1x1x1x8xf32> to vector<1x1x8xf32>
    "tpu.trace_start"() <{level = 10 : i32, message = "bms,bsh->bmh"}> : () -> ()
    %cst = arith.constant dense<0.000000e+00> : vector<1x1x32xf32>
    %7 = tpu.matmul %6, %5, %cst {dimension_numbers = #tpu.dot_dimension_numbers<[2], [1], [1], [2], [0, 0, 0, 1, 1, 2], [0], [0]>, precision = #tpu.contract_precision<fp32>} : vector<1x1x8xf32>, vector<1x8x32xf32>, vector<1x1x32xf32> -> vector<1x1x32xf32>
    "tpu.trace_stop"() : () -> ()
    %cst_8 = arith.constant dense<0.000000e+00> : vector<1x1xf32>
    %8 = vector.multi_reduction <add>, %6, %cst_8 [2] : vector<1x1x8xf32> to vector<1x1xf32>
    %9 = vector.shape_cast %8 : vector<1x1xf32> to vector<1x1x1xf32>
    %cst_9 = arith.constant 9.99999971E-10 : f32
    %10 = vector.broadcast %cst_9 : f32 to vector<1x1x1xf32>
    %11 = arith.maximumf %9, %10 : vector<1x1x1xf32>
    %c0_10 = arith.constant 0 : index
    %c0_11 = arith.constant 0 : index
    %c0_12 = arith.constant 0 : index
    %12 = vector.load %arg7[%c0_10, %c0_11, %c0_12] : memref<1x1x32xf32, #tpu.memory_space<vmem>>, vector<1x1x32xf32>
    %13 = vector.broadcast %11 : vector<1x1x1xf32> to vector<1x1x32xf32>
    %14 = arith.divf %7, %13 : vector<1x1x32xf32>
    %15 = arith.addf %12, %14 : vector<1x1x32xf32>
    %c0_13 = arith.constant 0 : index
    %c0_14 = arith.constant 0 : index
    %c0_15 = arith.constant 0 : index
    %16 = vector.load %arg7[%c0_13, %c0_14, %c0_15] : memref<1x1x32xf32, #tpu.memory_space<vmem>>, vector<1x1x32xf32>
    tpu.vector_store %arg7[%c0_13, %c0_14, %c0_15], %15 {strides = array<i32>} : memref<1x1x32xf32, #tpu.memory_space<vmem>>, vector<1x1x32xf32>,
    %c2_i32 = arith.constant 2 : i32
    %17 = arith.cmpi eq, %arg1, %c2_i32 : i32
    %18 = arith.extui %17 : i1 to i32
    %c0_i32_16 = arith.constant 0 : i32
    %19 = arith.cmpi ne, %18, %c0_i32_16 : i32
    scf.if %19 {
      %c0_17 = arith.constant 0 : index
      %c0_18 = arith.constant 0 : index
      %c0_19 = arith.constant 0 : index
      %20 = vector.load %arg7[%c0_17, %c0_18, %c0_19] : memref<1x1x32xf32, #tpu.memory_space<vmem>>, vector<1x1x32xf32>
      %cst_20 = arith.constant 0.333333343 : f32
      %21 = vector.broadcast %cst_20 : f32 to vector<1x1x32xf32>
      %22 = arith.mulf %20, %21 : vector<1x1x32xf32>
      %c0_21 = arith.constant 0 : index
      %c0_22 = arith.constant 0 : index
      %c0_23 = arith.constant 0 : index
      %23 = vector.load %arg4[%c0_21, %c0_22, %c0_23] : memref<1x8x32xf32, #tpu.memory_space<vmem>>, vector<1x8x32xf32>
      %cst_24 = arith.constant 1.000000e+00 : f32
      %24 = vector.broadcast %cst_24 : f32 to vector<1x1x8xf32>
      "tpu.trace_start"() <{level = 10 : i32, message = "bms,bsh->bmh"}> : () -> ()
      %cst_25 = arith.constant dense<0.000000e+00> : vector<1x1x32xf32>
      %25 = tpu.matmul %24, %23, %cst_25 {dimension_numbers = #tpu.dot_dimension_numbers<[2], [1], [1], [2], [0, 0, 0, 1, 1, 2], [0], [0]>, precision = #tpu.contract_precision<fp32>} : vector<1x1x8xf32>, vector<1x8x32xf32>, vector<1x1x32xf32> -> vector<1x1x32xf32>
      "tpu.trace_stop"() : () -> ()
      %c0_26 = arith.constant 0 : index
      %c0_27 = arith.constant 0 : index
      %c0_28 = arith.constant 0 : index
      %26 = vector.load %arg5[%c0_26, %c0_27, %c0_28] : memref<1x1x8xf32, #tpu.memory_space<vmem>>, vector<1x1x8xf32>
      %cst_29 = arith.constant dense<0.000000e+00> : vector<1x1xf32>
      %27 = vector.multi_reduction <add>, %26, %cst_29 [2] : vector<1x1x8xf32> to vector<1x1xf32>
      %28 = vector.shape_cast %27 : vector<1x1xf32> to vector<1x1x1xf32>
      %29 = vector.broadcast %28 : vector<1x1x1xf32> to vector<1x1x32xf32>
      %30 = arith.divf %25, %29 : vector<1x1x32xf32>
      %31 = arith.subf %22, %30 : vector<1x1x32xf32>
      %cst_30 = arith.constant 0.000000e+00 : f32
      %32 = vector.broadcast %cst_30 : f32 to vector<1x1x32xf32>
      %33 = arith.maximumf %31, %32 : vector<1x1x32xf32>
      %34 = arith.mulf %33, %33 : vector<1x1x32xf32>
      %cst_31 = arith.constant dense<0.000000e+00> : vector<1x1xf32>
      %35 = vector.multi_reduction <add>, %34, %cst_31 [2] : vector<1x1x32xf32> to vector<1x1xf32>
      %36 = vector.shape_cast %35 : vector<1x1xf32> to vector<1x1x1xf32>
      %c0_32 = arith.constant 0 : index
      %c0_33 = arith.constant 0 : index
      %c0_34 = arith.constant 0 : index
      %37 = vector.load %arg6[%c0_32, %c0_33, %c0_34] : memref<1x1x1xf32, #tpu.memory_space<vmem>>, vector<1x1x1xf32>
      tpu.vector_store %arg6[%c0_32, %c0_33, %c0_34], %36 {strides = array<i32>} : memref<1x1x1xf32, #tpu.memory_space<vmem>>, vector<1x1x1xf32>,
    } else {
    }
    return
  }
  func.func @transform_0(%arg0: i32, %arg1: i32) -> (i32, i32, i32, i32) {
    %c0_i32 = arith.constant 0 : i32
    %c0_i32_0 = arith.constant 0 : i32
    %c0_i32_1 = arith.constant 0 : i32
    return %arg0, %arg1, %c0_i32, %c0_i32_0 : i32, i32, i32, i32
  }
  func.func @transform_1(%arg0: i32, %arg1: i32) -> (i32, i32, i32, i32) {
    %c0_i32 = arith.constant 0 : i32
    %c0_i32_0 = arith.constant 0 : i32
    %c0_i32_1 = arith.constant 0 : i32
    return %arg0, %arg1, %c0_i32, %c0_i32_0 : i32, i32, i32, i32
  }
  func.func @transform_2(%arg0: i32, %arg1: i32) -> (i32, i32, i32) {
    %c0_i32 = arith.constant 0 : i32
    %c0_i32_0 = arith.constant 0 : i32
    %c0_i32_1 = arith.constant 0 : i32
    return %arg0, %c0_i32, %c0_i32_0 : i32, i32, i32
  }
  func.func @transform_3(%arg0: i32, %arg1: i32) -> (i32, i32, i32) {
    %c0_i32 = arith.constant 0 : i32
    %c0_i32_0 = arith.constant 0 : i32
    %c0_i32_1 = arith.constant 0 : i32
    return %arg0, %c0_i32, %c0_i32_0 : i32, i32, i32
  }
  func.func @transform_4(%arg0: i32, %arg1: i32) -> (i32, i32, i32) {
    %c0_i32 = arith.constant 0 : i32
    %c0_i32_0 = arith.constant 0 : i32
    %c0_i32_1 = arith.constant 0 : i32
    return %arg0, %c0_i32, %c0_i32_0 : i32, i32, i32
  }
}

</mosaic_0001>

<llo_original>
// kernel: tpu_custom_call.1
$region0: #{tpu_custom_call.1}
  #allocation0 [shape = 'u32[]', space=smem, size = 0x4, offset = 0x4, fixed_abs, tag = 'smem constant byte address 0x4 - core index']
  #allocation1 [shape = 'u32[144,128]{1,0:T(1,128)}', space=vmem, size = 0x12000, scoped, tag = 'internal scratch']
  #allocation2 [shape = 'f32[1,1,32]{2,1,0:T(1,128)}', space=vmem, size = 0x200, scoped, tag = 'scratch operand']
  %s0 = inlined_call_operand.hbm [shape: f32[2,3,8,32], index: 0, kind: input, shape index: {}]
  %s1 = inlined_call_operand.hbm [shape: f32[2,3,1,8], index: 1, kind: input, shape index: {}]
  %s2 = inlined_call_operand.hbm [shape: f32[2,8,32], index: 2, kind: input, shape index: {}]
  %s3 = inlined_call_operand.vmem [shape: f32[2,1,8], index: 3, kind: input, shape index: {}]
  %s4 = inlined_call_operand.vmem [shape: f32[2,1,1], index: 4, kind: output, shape index: {}]
  %s5 = sld [smem:[#allocation0]]
  $region69: #{tpu_custom_call.1} parent=0
    _
  %s7 = ssub.s32 1, %s5
  %s8 = scalar_select 0, %s7, %s5
  $region1: #{tpu_custom_call.1} parent=0
    #allocation3 [shape = 'u8[8192]{0}', space=vmem, size = 0x2000, scoped, tag = 'input window, operand 0']
    #allocation4 [shape = 's32[2]{0}', space=sflag, size = 0x8, scoped, tag = 'scoped memory for tpu_custom_call.1']
    #allocation5 [shape = 'u8[1024]{0}', space=vmem, size = 0x400, scoped, tag = 'input window, operand 1']
    #allocation6 [shape = 's32[2]{0}', space=sflag, size = 0x8, scoped, tag = 'scoped memory for tpu_custom_call.1']
    #allocation7 [shape = 'u8[4096]{0}', space=vmem, size = 0x1000, scoped, tag = 'input window, operand 2, single buffered']
    %9 = vsyncpa [#allocation4], 0
    %s10 = scalar_lea.sflag [#allocation4], 1
    %11 = vsyncpa %s10, 0
    %12 = vsyncpa [#allocation6], 0
    %s13 = scalar_lea.sflag [#allocation6], 1
    %14 = vsyncpa %s13, 0
    loop: start=0, step=1, limit=8
    $region2: #{tpu_custom_call.1} parent=1 // loop_pre_header
      _
    $region3: #{tpu_custom_call.1} parent=1 // loop_header
      %s16 = sphi 0, %s20
      %p17 = scmp.ge.s32.totalorder %s16, 8
      %s23 = sphi 0, %s35
      %s24 = sphi 0, %s31
      %s25 = sphi 0, %s23
      %s26 = sphi 0, %s24
      %s27 = sphi 0, %s25
      %s28 = sphi 0, %s26
      %s40 = sphi 0, %s42
      %s43 = sphi 0, %s40
      %s44 = sphi 0, %s43
      %s60 = sphi 0, %s44
      %s68 = sphi 0, %s70
      %s71 = sphi 0, %s68
      %s72 = sphi 0, %s71
      %s88 = sphi 0, %s72
      %s94 = sphi 0, %s96
      %s97 = sphi 0, %s94
      %s98 = sphi 0, %s97
      %s114 = sphi 0, %s98
      %s120 = sphi 0, %s122
      %s123 = sphi 0, %s120
      %s124 = sphi 0, %s123
      %s140 = sphi 0, %s124
      %s146 = sphi 0, %s148
      %s149 = sphi 0, %s146
      %s150 = sphi 0, %s149
      %s166 = sphi 0, %s150
    $region4: #{tpu_custom_call.1} parent=1 // loop_header_branch
      %19 = sbr.rel (%p17) target = $region8
    $region5: #{tpu_custom_call.1} parent=1 // loop_body
      %s21 = ssub.s32 %s16, 1
      %s22 = ssub.s32 %s16, 2
      %s29 = sadd.s32 1, %s24
      %p30 = scmp.ge.s32.totalorder %s29, 3
      %s31 = scalar_select %p30, 0, %s29
      %s32 = sadd.s32 1, %s23
      %s33 = scalar_select %p30, %s32, %s23
      %p34 = scmp.ge.s32.totalorder %s33, 2
      %s35 = scalar_select %p34, 0, %s33
      %s36 = ssub.s32 %s23, %s35
      %s37 = ssub.s32 %s24, %s31
      %s38 = sor.u32 %s36, %s37
      %p39 = scmp.eq.s32.totalorder %s38, 0
      %s41 = sadd.s32 %s40, 1
      %s42 = scalar_select %p39, %s40, %s41
      %p45 = pneg %p39
      %p46 = scmp.eq.s32.totalorder %s16, 5
      %p47 = por %p45, %p46
      %p48 = scmp.ne.s32.totalorder %s40, %s43
      %p49 = scmp.eq.s32.totalorder %s16, 0
      %p50 = por %p48, %p49
      %p51 = scmp.ne.s32.totalorder %s40, %s43
      %p52 = scmp.eq.s32.totalorder %s21, 5
      %p53 = por %p51, %p52
      %p54 = scmp.ne.s32.totalorder %s43, %s44
      %p55 = scmp.eq.s32.totalorder %s21, 0
      %p56 = por %p54, %p55
      %p57 = scmp.ne.s32.totalorder %s43, %s44
      %p58 = scmp.eq.s32.totalorder %s22, 5
      %p59 = por %p57, %p58
      %p61 = scmp.ne.s32.totalorder %s44, %s60
      %p62 = scmp.eq.s32.totalorder %s22, 0
      %p63 = por %p61, %p62
      %s64 = ssub.s32 %s23, %s35
      %s65 = ssub.s32 %s24, %s31
      %s66 = sor.u32 %s64, %s65
      %p67 = scmp.eq.s32.totalorder %s66, 0
      %s69 = sadd.s32 %s68, 1
      %s70 = scalar_select %p67, %s68, %s69
      %p73 = pneg %p67
      %p74 = scmp.eq.s32.totalorder %s16, 5
      %p75 = por %p73, %p74
      %p76 = scmp.ne.s32.totalorder %s68, %s71
      %p77 = scmp.eq.s32.totalorder %s16, 0
      %p78 = por %p76, %p77
      %p79 = scmp.ne.s32.totalorder %s68, %s71
      %p80 = scmp.eq.s32.totalorder %s21, 5
      %p81 = por %p79, %p80
      %p82 = scmp.ne.s32.totalorder %s71, %s72
      %p83 = scmp.eq.s32.totalorder %s21, 0
      %p84 = por %p82, %p83
      %p85 = scmp.ne.s32.totalorder %s71, %s72
      %p86 = scmp.eq.s32.totalorder %s22, 5
      %p87 = por %p85, %p86
      %p89 = scmp.ne.s32.totalorder %s72, %s88
      %p90 = scmp.eq.s32.totalorder %s22, 0
      %p91 = por %p89, %p90
      %s92 = ssub.s32 %s23, %s35
      %p93 = scmp.eq.s32.totalorder %s92, 0
      %s95 = sadd.s32 %s94, 1
      %s96 = scalar_select %p93, %s94, %s95
      %p99 = pneg %p93
      %p100 = scmp.eq.s32.totalorder %s16, 5
      %p101 = por %p99, %p100
      %p102 = scmp.ne.s32.totalorder %s94, %s97
      %p103 = scmp.eq.s32.totalorder %s16, 0
      %p104 = por %p102, %p103
      %p105 = scmp.ne.s32.totalorder %s94, %s97
      %p106 = scmp.eq.s32.totalorder %s21, 5
      %p107 = por %p105, %p106
      %p108 = scmp.ne.s32.totalorder %s97, %s98
      %p109 = scmp.eq.s32.totalorder %s21, 0
      %p110 = por %p108, %p109
      %p111 = scmp.ne.s32.totalorder %s97, %s98
      %p112 = scmp.eq.s32.totalorder %s22, 5
      %p113 = por %p111, %p112
      %p115 = scmp.ne.s32.totalorder %s98, %s114
      %p116 = scmp.eq.s32.totalorder %s22, 0
      %p117 = por %p115, %p116
      %s118 = ssub.s32 %s23, %s35
      %p119 = scmp.eq.s32.totalorder %s118, 0
      %s121 = sadd.s32 %s120, 1
      %s122 = scalar_select %p119, %s120, %s121
      %p125 = pneg %p119
      %p126 = scmp.eq.s32.totalorder %s16, 5
      %p127 = por %p125, %p126
      %p128 = scmp.ne.s32.totalorder %s120, %s123
      %p129 = scmp.eq.s32.totalorder %s16, 0
      %p130 = por %p128, %p129
      %p131 = scmp.ne.s32.totalorder %s120, %s123
      %p132 = scmp.eq.s32.totalorder %s21, 5
      %p133 = por %p131, %p132
      %p134 = scmp.ne.s32.totalorder %s123, %s124
      %p135 = scmp.eq.s32.totalorder %s21, 0
      %p136 = por %p134, %p135
      %p137 = scmp.ne.s32.totalorder %s123, %s124
      %p138 = scmp.eq.s32.totalorder %s22, 5
      %p139 = por %p137, %p138
      %p141 = scmp.ne.s32.totalorder %s124, %s140
      %p142 = scmp.eq.s32.totalorder %s22, 0
      %p143 = por %p141, %p142
      %s144 = ssub.s32 %s23, %s35
      %p145 = scmp.eq.s32.totalorder %s144, 0
      %s147 = sadd.s32 %s146, 1
      %s148 = scalar_select %p145, %s146, %s147
      %p151 = pneg %p145
      %p152 = scmp.eq.s32.totalorder %s16, 5
      %p153 = por %p151, %p152
      %p154 = scmp.ne.s32.totalorder %s146, %s149
      %p155 = scmp.eq.s32.totalorder %s16, 0
      %p156 = por %p154, %p155
      %p157 = scmp.ne.s32.totalorder %s146, %s149
      %p158 = scmp.eq.s32.totalorder %s21, 5
      %p159 = por %p157, %p158
      %p160 = scmp.ne.s32.totalorder %s149, %s150
      %p161 = scmp.eq.s32.totalorder %s21, 0
      %p162 = por %p160, %p161
      %p163 = scmp.ne.s32.totalorder %s149, %s150
      %p164 = scmp.eq.s32.totalorder %s22, 5
      %p165 = por %p163, %p164
      %p167 = scmp.ne.s32.totalorder %s150, %s166
      %p168 = scmp.eq.s32.totalorder %s22, 0
      %p169 = por %p167, %p168
      %p170 = scmp.le.s32.totalorder 1, %s16
      %p171 = scmp.lt.s32.totalorder %s16, 7
      %p172 = pnand %p170, %p171
      %p173 = pneg %p172
      // Predicated region
      $region9: #{tpu_custom_call.1} parent=5 // pred_check
        _
      $region10: #{tpu_custom_call.1} parent=5 // pred_check_branch
        %175 = sbr.rel (%p172) target = $region12
      $region11: #{tpu_custom_call.1} parent=5 // pred_region
        %s176 = ssub.s32 %s16, 1
        // Predicated region
        $region13: #{tpu_custom_call.1} parent=11 // pred_check
          %p177 = pneg %p110
        $region14: #{tpu_custom_call.1} parent=11 // pred_check_branch
          %179 = sbr.rel (%p177) target = $region16
        $region15: #{tpu_custom_call.1} parent=11 // pred_region
          %s181 = ssub.s32 128, 128
          %182 = vsyncadd [#allocation6], %s181
          %s183 = smul.addr %s25, 128
          %s184 = scalar_lea.hbm %s2, %s183
          %s186 = sshll.u32 [#allocation7], 4
          %s187 = int_to_ptr.vmem [resolvable:$true] %s186
          %189 = dma.hbm_to_vmem [thread:$0]  %s184, 128, %s187, [#allocation6]
        $region16: #{tpu_custom_call.1} parent=11 // pred_fallthru
          _
        // Predicated region
        $region17: #{tpu_custom_call.1} parent=11 // pred_check
          %p190 = pneg %p136
        $region18: #{tpu_custom_call.1} parent=11 // pred_check_branch
          %192 = sbr.rel (%p190) target = $region20
        $region19: #{tpu_custom_call.1} parent=11 // pred_region
          %p193 = scmp.lt.s32.totalorder %s25, 1
          %s194 = scalar_select %p193, %s25, 1
          %s195 = scalar_lea.vmem %s3, %s194
        $region20: #{tpu_custom_call.1} parent=11 // pred_fallthru
          _
      $region12: #{tpu_custom_call.1} parent=5 // pred_fallthru
        _
      %p196 = scmp.lt.s32.totalorder %s16, 6
      // Predicated region
      $region21: #{tpu_custom_call.1} parent=5 // pred_check
        %p197 = pneg %p196
      $region22: #{tpu_custom_call.1} parent=5 // pred_check_branch
        %199 = sbr.rel (%p197) target = $region24
      $region23: #{tpu_custom_call.1} parent=5 // pred_region
        // Predicated region
        $region25: #{tpu_custom_call.1} parent=23 // pred_check
          %p200 = pneg %p50
        $region26: #{tpu_custom_call.1} parent=23 // pred_check_branch
          %202 = sbr.rel (%p200) target = $region28
        $region27: #{tpu_custom_call.1} parent=23 // pred_region
          %s203 = sand.u32 %s40, 1
          %s204 = scalar_lea.sflag [#allocation4], %s203
          %s205 = sand.u32 %s40, 1
          %s206 = smul.addr %s205, 8
          %s207 = scalar_lea.vmem [#allocation3], %s206
          %s209 = ssub.s32 128, 128
          %210 = vsyncadd %s204, %s209
          %s211 = smul.addr %s23, 3
          %s212 = sadd.s32 %s24, %s211
          %s213 = smul.addr %s212, 128
          %s214 = scalar_lea.hbm %s0, %s213
          %s216 = sshll.u32 %s207, 4
          %s217 = int_to_ptr.vmem [resolvable:$true] %s216
          %219 = dma.hbm_to_vmem [thread:$0]  %s214, 128, %s217, %s204
        $region28: #{tpu_custom_call.1} parent=23 // pred_fallthru
          _
        // Predicated region
        $region29: #{tpu_custom_call.1} parent=23 // pred_check
          %p220 = pneg %p78
        $region30: #{tpu_custom_call.1} parent=23 // pred_check_branch
          %222 = sbr.rel (%p220) target = $region32
        $region31: #{tpu_custom_call.1} parent=23 // pred_region
          %s223 = sand.u32 %s16, 1
          %s224 = scalar_lea.sflag [#allocation6], %s223
          %s225 = sand.u32 %s68, 1
          %s226 = scalar_lea.vmem [#allocation5], %s225
          %s228 = ssub.s32 16, 16
          %229 = vsyncadd %s224, %s228
          %s230 = smul.addr %s23, 3
          %s231 = sadd.s32 %s24, %s230
          %s232 = smul.addr %s231, 16
          %s233 = scalar_lea.hbm %s1, %s232
          %s235 = sshll.u32 %s226, 4
          %s236 = int_to_ptr.vmem [resolvable:$true] %s235
          %238 = dma.hbm_to_vmem [thread:$0]  %s233, 16, %s236, %s224
        $region32: #{tpu_custom_call.1} parent=23 // pred_fallthru
          _
      $region24: #{tpu_custom_call.1} parent=5 // pred_fallthru
        _
      %p239 = scmp.le.s32.totalorder 1, %s16
      %p240 = scmp.lt.s32.totalorder %s16, 7
      %p241 = pnand %p239, %p240
      %p242 = pneg %p241
      // Predicated region
      $region33: #{tpu_custom_call.1} parent=5 // pred_check
        _
      $region34: #{tpu_custom_call.1} parent=5 // pred_check_branch
        %244 = sbr.rel (%p241) target = $region36
      $region35: #{tpu_custom_call.1} parent=5 // pred_region
        %s245 = ssub.s32 %s16, 1
        %s246 = sand.u32 %s43, 1
        %s247 = scalar_lea.sflag [#allocation4], %s246
        %s248 = sand.u32 %s43, 1
        %s249 = smul.addr %s248, 8
        %s250 = scalar_lea.vmem [#allocation3], %s249
        // Predicated region
        $region37: #{tpu_custom_call.1} parent=35 // pred_check
          %p251 = pneg %p56
        $region38: #{tpu_custom_call.1} parent=35 // pred_check_branch
          %253 = sbr.rel (%p251) target = $region40
        $region39: #{tpu_custom_call.1} parent=35 // pred_region
          %254 = dma.done %s247, 128
        $region40: #{tpu_custom_call.1} parent=35 // pred_fallthru
          _
        %s255 = sand.u32 %s21, 1
        %s256 = scalar_lea.sflag [#allocation6], %s255
        %s257 = sand.u32 %s71, 1
        %s258 = scalar_lea.vmem [#allocation5], %s257
        // Predicated region
        $region41: #{tpu_custom_call.1} parent=35 // pred_check
          %p259 = pneg %p84
        $region42: #{tpu_custom_call.1} parent=35 // pred_check_branch
          %261 = sbr.rel (%p259) target = $region44
        $region43: #{tpu_custom_call.1} parent=35 // pred_region
          %262 = dma.done %s256, 16
        $region44: #{tpu_custom_call.1} parent=35 // pred_fallthru
          _
        // Predicated region
        $region45: #{tpu_custom_call.1} parent=35 // pred_check
          %p263 = pneg %p110
        $region46: #{tpu_custom_call.1} parent=35 // pred_check_branch
          %265 = sbr.rel (%p263) target = $region48
        $region47: #{tpu_custom_call.1} parent=35 // pred_region
          %266 = dma.done [#allocation6], 128
        $region48: #{tpu_custom_call.1} parent=35 // pred_fallthru
          _
        %s267 = sand.u32 %s43, 1
        %s268 = scalar_lea.sflag [#allocation4], %s267
        %s269 = sand.u32 %s43, 1
        %s270 = smul.addr %s269, 8
        %s271 = scalar_lea.vmem [#allocation3], %s270
        %p272 = pneg %p56
        %p273 = pneg %p53
        %s274 = sand.u32 %s21, 1
        %s275 = scalar_lea.sflag [#allocation6], %s274
        %s276 = sand.u32 %s71, 1
        %s277 = scalar_lea.vmem [#allocation5], %s276
        %p278 = pneg %p84
        %p279 = pneg %p81
        %p280 = pneg %p110
        %p281 = pneg %p107
        %p282 = scmp.lt.s32.totalorder %s25, 1
        %s283 = scalar_select %p282, %s25, 1
        %s284 = scalar_lea.vmem %s3, %s283
        %p285 = pneg %p136
        %p286 = pneg %p133
        %p287 = pneg %p162
        %p288 = pneg %p159
        %p289 = scmp.lt.s32.totalorder %s25, 1
        %s290 = scalar_select %p289, %s25, 1
        %s291 = scalar_lea.vmem %s4, %s290
        %p292 = scmp.lt.s32.totalorder %s25, 1
        %s293 = scalar_select %p292, %s25, 1
        %s294 = scalar_lea.vmem %s3, %s293
        %p295 = scmp.lt.s32.totalorder %s25, 1
        %s296 = scalar_select %p295, %s25, 1
        %s297 = scalar_lea.vmem %s4, %s296
        %p298 = scmp.eq.s32.totalorder %s26, 0
        // Predicated region
        $region49: #{tpu_custom_call.1} parent=35 // pred_check
          %p299 = pneg %p298
        $region50: #{tpu_custom_call.1} parent=35 // pred_check_branch
          %301 = sbr.rel (%p299) target = $region52
        $region51: #{tpu_custom_call.1} parent=35 // pred_region
          %vm302 = vcmask 253952
          %303 = vst.msk [vmem:[#allocation2] sm:$0x1] %vm302, 0.0
        $region52: #{tpu_custom_call.1} parent=35 // pred_fallthru
          _
        %v304 = vld [vmem:[%s250] sm:$0xff]
        %v305 = vld [vmem:[%s258] sm:$0x1]
        %vm306 = vcmask 64512
        %v308 = vsel %vm306, %v305, 0
        %310 = vmatprep.subr.mxu0 0.0
        %v311 = vand.u32 %v304, 4294901760
        %312 = vmatpush1.msra.mxu0 %v311
        %313 = vmatprep.subr.mxu0 0.0
        %314 = vmatpush1.msra.mxu0 0.0
        %315 = vmatprep.subr.mxu0 0.0
        %316 = vmatpush1.msra.mxu0 0.0
        %317 = vmatprep.subr.mxu0 0.0
        %318 = vmatpush1.msra.mxu0 0.0
        %319 = vmatprep.subr.mxu0 0.0
        %320 = vmatpush1.msra.mxu0 0.0
        %321 = vmatprep.subr.mxu0 0.0
        %322 = vmatpush1.msra.mxu0 0.0
        %323 = vmatprep.subr.mxu0 0.0
        %324 = vmatpush1.msra.mxu0 0.0
        %325 = vmatprep.subr.mxu0 0.0
        %326 = vmatpush1.msra.mxu0 0.0
        %327 = vmatprep.subr.mxu0 0.0
        %328 = vmatpush1.msra.mxu0 0.0
        %329 = vmatprep.subr.mxu0 0.0
        %330 = vmatpush1.msra.mxu0 0.0
        %331 = vmatprep.subr.mxu0 0.0
        %332 = vmatpush1.msra.mxu0 0.0
        %333 = vmatprep.subr.mxu0 0.0
        %334 = vmatpush1.msra.mxu0 0.0
        %335 = vmatprep.subr.mxu0 0.0
        %336 = vmatpush1.msra.mxu0 0.0
        %337 = vmatprep.subr.mxu0 0.0
        %338 = vmatpush1.msra.mxu0 0.0
        %339 = vmatprep.subr.mxu0 0.0
        %340 = vmatpush1.msra.mxu0 0.0
        %341 = vmatprep.subr.mxu0 0.0
        %342 = vmatpush1.msra.mxu0 0.0
        %343 = vmatprep.subr.mxu0 0.0
        %344 = vmatpush1.msra.mxu0 0.0
        %345 = vmatprep.subr.mxu0 0.0
        %346 = vmatpush1.msra.mxu0 0.0
        %347 = vmatprep.subr.mxu0 0.0
        %348 = vmatpush1.msra.mxu0 0.0
        %349 = vmatprep.subr.mxu0 0.0
        %350 = vmatpush1.msra.mxu0 0.0
        %351 = vmatprep.subr.mxu0 0.0
        %352 = vmatpush1.msra.mxu0 0.0
        %353 = vmatprep.subr.mxu0 0.0
        %354 = vmatpush1.msra.mxu0 0.0
        %355 = vmatprep.subr.mxu0 0.0
        %356 = vmatpush1.msra.mxu0 0.0
        %357 = vmatprep.subr.mxu0 0.0
        %358 = vmatpush1.msra.mxu0 0.0
        %359 = vmatprep.subr.mxu0 0.0
        %360 = vmatpush1.msra.mxu0 0.0
        %361 = vmatprep.subr.mxu0 0.0
        %362 = vmatpush1.msra.mxu0 0.0
        %363 = vmatprep.subr.mxu0 0.0
        %364 = vmatpush1.msra.mxu0 0.0
        %365 = vmatprep.subr.mxu0 0.0
        %366 = vmatpush1.msra.mxu0 0.0
        %367 = vmatprep.subr.mxu0 0.0
        %368 = vmatpush1.msra.mxu0 0.0
        %369 = vmatprep.subr.mxu0 0.0
        %370 = vmatpush1.msra.mxu0 0.0
        %371 = vmatprep.subr.mxu0 0.0
        %372 = vmatpush1.msra.mxu0 0.0
        %373 = vmatprep.subr.mxu0 0.0
        %374 = vmatpush1.msra.mxu0 0.0
        %375 = vmatprep.mubr.f32.mxu0 0.0
        %v376 = vand.u32 %v308, 4294901760
        %v377 = vsub.f32 %v308, %v376
        %v378 = vand.u32 %v377, 4294901760
        %v379 = vsub.f32 %v377, %v378
        %v380 = vand.u32 %v379, 4294901760
        %381 = vmatmul.mubr.f32.gmra.mrb[0].mxu0 %v380
        %v382 = vpop.f32.mrb[0].mxu0
        %v383 = vadd.f32 0.0, %v382
        %v384 = vpop.f32.mrb[0].mxu0
        %385 = vdwg.mxu0
        %386 = vmatprep.subr.mxu0 0.0
        %v387 = vand.u32 %v304, 4294901760
        %v388 = vsub.f32 %v304, %v387
        %v389 = vand.u32 %v388, 4294901760
        %v390 = vsub.f32 %v388, %v389
        %v391 = vand.u32 %v390, 4294901760
        %392 = vmatpush1.msra.mxu0 %v391
        %393 = vmatprep.subr.mxu0 0.0
        %394 = vmatpush1.msra.mxu0 0.0
        %395 = vmatprep.subr.mxu0 0.0
        %396 = vmatpush1.msra.mxu0 0.0
        %397 = vmatprep.subr.mxu0 0.0
        %398 = vmatpush1.msra.mxu0 0.0
        %399 = vmatprep.subr.mxu0 0.0
        %400 = vmatpush1.msra.mxu0 0.0
        %401 = vmatprep.subr.mxu0 0.0
        %402 = vmatpush1.msra.mxu0 0.0
        %403 = vmatprep.subr.mxu0 0.0
        %404 = vmatpush1.msra.mxu0 0.0
        %405 = vmatprep.subr.mxu0 0.0
        %406 = vmatpush1.msra.mxu0 0.0
        %407 = vmatprep.subr.mxu0 0.0
        %408 = vmatpush1.msra.mxu0 0.0
        %409 = vmatprep.subr.mxu0 0.0
        %410 = vmatpush1.msra.mxu0 0.0
        %411 = vmatprep.subr.mxu0 0.0
        %412 = vmatpush1.msra.mxu0 0.0
        %413 = vmatprep.subr.mxu0 0.0
        %414 = vmatpush1.msra.mxu0 0.0
        %415 = vmatprep.subr.mxu0 0.0
        %416 = vmatpush1.msra.mxu0 0.0
        %417 = vmatprep.subr.mxu0 0.0
        %418 = vmatpush1.msra.mxu0 0.0
        %419 = vmatprep.subr.mxu0 0.0
        %420 = vmatpush1.msra.mxu0 0.0
        %421 = vmatprep.subr.mxu0 0.0
        %422 = vmatpush1.msra.mxu0 0.0
        %423 = vmatprep.subr.mxu0 0.0
        %424 = vmatpush1.msra.mxu0 0.0
        %425 = vmatprep.subr.mxu0 0.0
        %426 = vmatpush1.msra.mxu0 0.0
        %427 = vmatprep.subr.mxu0 0.0
        %428 = vmatpush1.msra.mxu0 0.0
        %429 = vmatprep.subr.mxu0 0.0
        %430 = vmatpush1.msra.mxu0 0.0
        %431 = vmatprep.subr.mxu0 0.0
        %432 = vmatpush1.msra.mxu0 0.0
        %433 = vmatprep.subr.mxu0 0.0
        %434 = vmatpush1.msra.mxu0 0.0
        %435 = vmatprep.subr.mxu0 0.0
        %436 = vmatpush1.msra.mxu0 0.0
        %437 = vmatprep.subr.mxu0 0.0
        %438 = vmatpush1.msra.mxu0 0.0
        %439 = vmatprep.subr.mxu0 0.0
        %440 = vmatpush1.msra.mxu0 0.0
        %441 = vmatprep.subr.mxu0 0.0
        %442 = vmatpush1.msra.mxu0 0.0
        %443 = vmatprep.subr.mxu0 0.0
        %444 = vmatpush1.msra.mxu0 0.0
        %445 = vmatprep.subr.mxu0 0.0
        %446 = vmatpush1.msra.mxu0 0.0
        %447 = vmatprep.subr.mxu0 0.0
        %448 = vmatpush1.msra.mxu0 0.0
        %449 = vmatprep.subr.mxu0 0.0
        %450 = vmatpush1.msra.mxu0 0.0
        %451 = vmatprep.subr.mxu0 0.0
        %452 = vmatpush1.msra.mxu0 0.0
        %453 = vmatprep.subr.mxu0 0.0
        %454 = vmatpush1.msra.mxu0 0.0
        %455 = vmatprep.mubr.f32.mxu0 0.0
        %v456 = vand.u32 %v308, 4294901760
        %457 = vmatmul.mubr.f32.gmra.mrb[0].mxu0 %v456
        %v458 = vpop.f32.mrb[0].mxu0
        %v459 = vadd.f32 %v383, %v458
        %v460 = vpop.f32.mrb[0].mxu0
        %461 = vdwg.mxu0
        %462 = vmatprep.subr.mxu0 0.0
        %v463 = vand.u32 %v304, 4294901760
        %v464 = vsub.f32 %v304, %v463
        %465 = vmatpush1.msra.mxu0 %v464
        %466 = vmatprep.subr.mxu0 0.0
        %467 = vmatpush1.msra.mxu0 0.0
        %468 = vmatprep.subr.mxu0 0.0
        %469 = vmatpush1.msra.mxu0 0.0
        %470 = vmatprep.subr.mxu0 0.0
        %471 = vmatpush1.msra.mxu0 0.0
        %472 = vmatprep.subr.mxu0 0.0
        %473 = vmatpush1.msra.mxu0 0.0
        %474 = vmatprep.subr.mxu0 0.0
        %475 = vmatpush1.msra.mxu0 0.0
        %476 = vmatprep.subr.mxu0 0.0
        %477 = vmatpush1.msra.mxu0 0.0
        %478 = vmatprep.subr.mxu0 0.0
        %479 = vmatpush1.msra.mxu0 0.0
        %480 = vmatprep.subr.mxu0 0.0
        %481 = vmatpush1.msra.mxu0 0.0
        %482 = vmatprep.subr.mxu0 0.0
        %483 = vmatpush1.msra.mxu0 0.0
        %484 = vmatprep.subr.mxu0 0.0
        %485 = vmatpush1.msra.mxu0 0.0
        %486 = vmatprep.subr.mxu0 0.0
        %487 = vmatpush1.msra.mxu0 0.0
        %488 = vmatprep.subr.mxu0 0.0
        %489 = vmatpush1.msra.mxu0 0.0
        %490 = vmatprep.subr.mxu0 0.0
        %491 = vmatpush1.msra.mxu0 0.0
        %492 = vmatprep.subr.mxu0 0.0
        %493 = vmatpush1.msra.mxu0 0.0
        %494 = vmatprep.subr.mxu0 0.0
        %495 = vmatpush1.msra.mxu0 0.0
        %496 = vmatprep.subr.mxu0 0.0
        %497 = vmatpush1.msra.mxu0 0.0
        %498 = vmatprep.subr.mxu0 0.0
        %499 = vmatpush1.msra.mxu0 0.0
        %500 = vmatprep.subr.mxu0 0.0
        %501 = vmatpush1.msra.mxu0 0.0
        %502 = vmatprep.subr.mxu0 0.0
        %503 = vmatpush1.msra.mxu0 0.0
        %504 = vmatprep.subr.mxu0 0.0
        %505 = vmatpush1.msra.mxu0 0.0
        %506 = vmatprep.subr.mxu0 0.0
        %507 = vmatpush1.msra.mxu0 0.0
        %508 = vmatprep.subr.mxu0 0.0
        %509 = vmatpush1.msra.mxu0 0.0
        %510 = vmatprep.subr.mxu0 0.0
        %511 = vmatpush1.msra.mxu0 0.0
        %512 = vmatprep.subr.mxu0 0.0
        %513 = vmatpush1.msra.mxu0 0.0
        %514 = vmatprep.subr.mxu0 0.0
        %515 = vmatpush1.msra.mxu0 0.0
        %516 = vmatprep.subr.mxu0 0.0
        %517 = vmatpush1.msra.mxu0 0.0
        %518 = vmatprep.subr.mxu0 0.0
        %519 = vmatpush1.msra.mxu0 0.0
        %520 = vmatprep.subr.mxu0 0.0
        %521 = vmatpush1.msra.mxu0 0.0
        %522 = vmatprep.subr.mxu0 0.0
        %523 = vmatpush1.msra.mxu0 0.0
        %524 = vmatprep.subr.mxu0 0.0
        %525 = vmatpush1.msra.mxu0 0.0
        %526 = vmatprep.subr.mxu0 0.0
        %527 = vmatpush1.msra.mxu0 0.0
        %528 = vmatprep.mubr.f32.mxu0 0.0
        %v529 = vand.u32 %v308, 4294901760
        %v530 = vsub.f32 %v308, %v529
        %531 = vmatmul.mubr.f32.gmra.mrb[0].mxu0 %v530
        %v532 = vpop.f32.mrb[0].mxu0
        %v533 = vadd.f32 %v459, %v532
        %v534 = vpop.f32.mrb[0].mxu0
        %535 = vdwg.mxu0
        %536 = vmatprep.subr.mxu0 0.0
        %v537 = vand.u32 %v304, 4294901760
        %538 = vmatpush1.msra.mxu0 %v537
        %539 = vmatprep.subr.mxu0 0.0
        %540 = vmatpush1.msra.mxu0 0.0
        %541 = vmatprep.subr.mxu0 0.0
        %542 = vmatpush1.msra.mxu0 0.0
        %543 = vmatprep.subr.mxu0 0.0
        %544 = vmatpush1.msra.mxu0 0.0
        %545 = vmatprep.subr.mxu0 0.0
        %546 = vmatpush1.msra.mxu0 0.0
        %547 = vmatprep.subr.mxu0 0.0
        %548 = vmatpush1.msra.mxu0 0.0
        %549 = vmatprep.subr.mxu0 0.0
        %550 = vmatpush1.msra.mxu0 0.0
        %551 = vmatprep.subr.mxu0 0.0
        %552 = vmatpush1.msra.mxu0 0.0
        %553 = vmatprep.subr.mxu0 0.0
        %554 = vmatpush1.msra.mxu0 0.0
        %555 = vmatprep.subr.mxu0 0.0
        %556 = vmatpush1.msra.mxu0 0.0
        %557 = vmatprep.subr.mxu0 0.0
        %558 = vmatpush1.msra.mxu0 0.0
        %559 = vmatprep.subr.mxu0 0.0
        %560 = vmatpush1.msra.mxu0 0.0
        %561 = vmatprep.subr.mxu0 0.0
        %562 = vmatpush1.msra.mxu0 0.0
        %563 = vmatprep.subr.mxu0 0.0
        %564 = vmatpush1.msra.mxu0 0.0
        %565 = vmatprep.subr.mxu0 0.0
        %566 = vmatpush1.msra.mxu0 0.0
        %567 = vmatprep.subr.mxu0 0.0
        %568 = vmatpush1.msra.mxu0 0.0
        %569 = vmatprep.subr.mxu0 0.0
        %570 = vmatpush1.msra.mxu0 0.0
        %571 = vmatprep.subr.mxu0 0.0
        %572 = vmatpush1.msra.mxu0 0.0
        %573 = vmatprep.subr.mxu0 0.0
        %574 = vmatpush1.msra.mxu0 0.0
        %575 = vmatprep.subr.mxu0 0.0
        %576 = vmatpush1.msra.mxu0 0.0
        %577 = vmatprep.subr.mxu0 0.0
        %578 = vmatpush1.msra.mxu0 0.0
        %579 = vmatprep.subr.mxu0 0.0
        %580 = vmatpush1.msra.mxu0 0.0
        %581 = vmatprep.subr.mxu0 0.0
        %582 = vmatpush1.msra.mxu0 0.0
        %583 = vmatprep.subr.mxu0 0.0
        %584 = vmatpush1.msra.mxu0 0.0
        %585 = vmatprep.subr.mxu0 0.0
        %586 = vmatpush1.msra.mxu0 0.0
        %587 = vmatprep.subr.mxu0 0.0
        %588 = vmatpush1.msra.mxu0 0.0
        %589 = vmatprep.subr.mxu0 0.0
        %590 = vmatpush1.msra.mxu0 0.0
        %591 = vmatprep.subr.mxu0 0.0
        %592 = vmatpush1.msra.mxu0 0.0
        %593 = vmatprep.subr.mxu0 0.0
        %594 = vmatpush1.msra.mxu0 0.0
        %595 = vmatprep.subr.mxu0 0.0
        %596 = vmatpush1.msra.mxu0 0.0
        %597 = vmatprep.subr.mxu0 0.0
        %598 = vmatpush1.msra.mxu0 0.0
        %599 = vmatprep.subr.mxu0 0.0
        %600 = vmatpush1.msra.mxu0 0.0
        %601 = vmatprep.mubr.f32.mxu0 0.0
        %v602 = vand.u32 %v308, 4294901760
        %v603 = vsub.f32 %v308, %v602
        %v604 = vand.u32 %v603, 4294901760
        %605 = vmatmul.mubr.f32.gmra.mrb[0].mxu0 %v604
        %v606 = vpop.f32.mrb[0].mxu0
        %v607 = vadd.f32 %v533, %v606
        %v608 = vpop.f32.mrb[0].mxu0
        %609 = vdwg.mxu0
        %610 = vmatprep.subr.mxu0 0.0
        %v611 = vand.u32 %v304, 4294901760
        %v612 = vsub.f32 %v304, %v611
        %v613 = vand.u32 %v612, 4294901760
        %614 = vmatpush1.msra.mxu0 %v613
        %615 = vmatprep.subr.mxu0 0.0
        %616 = vmatpush1.msra.mxu0 0.0
        %617 = vmatprep.subr.mxu0 0.0
        %618 = vmatpush1.msra.mxu0 0.0
        %619 = vmatprep.subr.mxu0 0.0
        %620 = vmatpush1.msra.mxu0 0.0
        %621 = vmatprep.subr.mxu0 0.0
        %622 = vmatpush1.msra.mxu0 0.0
        %623 = vmatprep.subr.mxu0 0.0
        %624 = vmatpush1.msra.mxu0 0.0
        %625 = vmatprep.subr.mxu0 0.0
        %626 = vmatpush1.msra.mxu0 0.0
        %627 = vmatprep.subr.mxu0 0.0
        %628 = vmatpush1.msra.mxu0 0.0
        %629 = vmatprep.subr.mxu0 0.0
        %630 = vmatpush1.msra.mxu0 0.0
        %631 = vmatprep.subr.mxu0 0.0
        %632 = vmatpush1.msra.mxu0 0.0
        %633 = vmatprep.subr.mxu0 0.0
        %634 = vmatpush1.msra.mxu0 0.0
        %635 = vmatprep.subr.mxu0 0.0
        %636 = vmatpush1.msra.mxu0 0.0
        %637 = vmatprep.subr.mxu0 0.0
        %638 = vmatpush1.msra.mxu0 0.0
        %639 = vmatprep.subr.mxu0 0.0
        %640 = vmatpush1.msra.mxu0 0.0
        %641 = vmatprep.subr.mxu0 0.0
        %642 = vmatpush1.msra.mxu0 0.0
        %643 = vmatprep.subr.mxu0 0.0
        %644 = vmatpush1.msra.mxu0 0.0
        %645 = vmatprep.subr.mxu0 0.0
        %646 = vmatpush1.msra.mxu0 0.0
        %647 = vmatprep.subr.mxu0 0.0
        %648 = vmatpush1.msra.mxu0 0.0
        %649 = vmatprep.subr.mxu0 0.0
        %650 = vmatpush1.msra.mxu0 0.0
        %651 = vmatprep.subr.mxu0 0.0
        %652 = vmatpush1.msra.mxu0 0.0
        %653 = vmatprep.subr.mxu0 0.0
        %654 = vmatpush1.msra.mxu0 0.0
        %655 = vmatprep.subr.mxu0 0.0
        %656 = vmatpush1.msra.mxu0 0.0
        %657 = vmatprep.subr.mxu0 0.0
        %658 = vmatpush1.msra.mxu0 0.0
        %659 = vmatprep.subr.mxu0 0.0
        %660 = vmatpush1.msra.mxu0 0.0
        %661 = vmatprep.subr.mxu0 0.0
        %662 = vmatpush1.msra.mxu0 0.0
        %663 = vmatprep.subr.mxu0 0.0
        %664 = vmatpush1.msra.mxu0 0.0
        %665 = vmatprep.subr.mxu0 0.0
        %666 = vmatpush1.msra.mxu0 0.0
        %667 = vmatprep.subr.mxu0 0.0
        %668 = vmatpush1.msra.mxu0 0.0
        %669 = vmatprep.subr.mxu0 0.0
        %670 = vmatpush1.msra.mxu0 0.0
        %671 = vmatprep.subr.mxu0 0.0
        %672 = vmatpush1.msra.mxu0 0.0
        %673 = vmatprep.subr.mxu0 0.0
        %674 = vmatpush1.msra.mxu0 0.0
        %675 = vmatprep.subr.mxu0 0.0
        %676 = vmatpush1.msra.mxu0 0.0
        %677 = vmatprep.mubr.f32.mxu0 0.0
        %v678 = vand.u32 %v308, 4294901760
        %679 = vmatmul.mubr.f32.gmra.mrb[0].mxu0 %v678
        %v680 = vpop.f32.mrb[0].mxu0
        %v681 = vadd.f32 %v607, %v680
        %v682 = vpop.f32.mrb[0].mxu0
        %683 = vdwg.mxu0
        %684 = vmatprep.subr.mxu0 0.0
        %v685 = vand.u32 %v304, 4294901760
        %686 = vmatpush1.msra.mxu0 %v685
        %687 = vmatprep.subr.mxu0 0.0
        %688 = vmatpush1.msra.mxu0 0.0
        %689 = vmatprep.subr.mxu0 0.0
        %690 = vmatpush1.msra.mxu0 0.0
        %691 = vmatprep.subr.mxu0 0.0
        %692 = vmatpush1.msra.mxu0 0.0
        %693 = vmatprep.subr.mxu0 0.0
        %694 = vmatpush1.msra.mxu0 0.0
        %695 = vmatprep.subr.mxu0 0.0
        %696 = vmatpush1.msra.mxu0 0.0
        %697 = vmatprep.subr.mxu0 0.0
        %698 = vmatpush1.msra.mxu0 0.0
        %699 = vmatprep.subr.mxu0 0.0
        %700 = vmatpush1.msra.mxu0 0.0
        %701 = vmatprep.subr.mxu0 0.0
        %702 = vmatpush1.msra.mxu0 0.0
        %703 = vmatprep.subr.mxu0 0.0
        %704 = vmatpush1.msra.mxu0 0.0
        %705 = vmatprep.subr.mxu0 0.0
        %706 = vmatpush1.msra.mxu0 0.0
        %707 = vmatprep.subr.mxu0 0.0
        %708 = vmatpush1.msra.mxu0 0.0
        %709 = vmatprep.subr.mxu0 0.0
        %710 = vmatpush1.msra.mxu0 0.0
        %711 = vmatprep.subr.mxu0 0.0
        %712 = vmatpush1.msra.mxu0 0.0
        %713 = vmatprep.subr.mxu0 0.0
        %714 = vmatpush1.msra.mxu0 0.0
        %715 = vmatprep.subr.mxu0 0.0
        %716 = vmatpush1.msra.mxu0 0.0
        %717 = vmatprep.subr.mxu0 0.0
        %718 = vmatpush1.msra.mxu0 0.0
        %719 = vmatprep.subr.mxu0 0.0
        %720 = vmatpush1.msra.mxu0 0.0
        %721 = vmatprep.subr.mxu0 0.0
        %722 = vmatpush1.msra.mxu0 0.0
        %723 = vmatprep.subr.mxu0 0.0
        %724 = vmatpush1.msra.mxu0 0.0
        %725 = vmatprep.subr.mxu0 0.0
        %726 = vmatpush1.msra.mxu0 0.0
        %727 = vmatprep.subr.mxu0 0.0
        %728 = vmatpush1.msra.mxu0 0.0
        %729 = vmatprep.subr.mxu0 0.0
        %730 = vmatpush1.msra.mxu0 0.0
        %731 = vmatprep.subr.mxu0 0.0
        %732 = vmatpush1.msra.mxu0 0.0
        %733 = vmatprep.subr.mxu0 0.0
        %734 = vmatpush1.msra.mxu0 0.0
        %735 = vmatprep.subr.mxu0 0.0
        %736 = vmatpush1.msra.mxu0 0.0
        %737 = vmatprep.subr.mxu0 0.0
        %738 = vmatpush1.msra.mxu0 0.0
        %739 = vmatprep.subr.mxu0 0.0
        %740 = vmatpush1.msra.mxu0 0.0
        %741 = vmatprep.subr.mxu0 0.0
        %742 = vmatpush1.msra.mxu0 0.0
        %743 = vmatprep.subr.mxu0 0.0
        %744 = vmatpush1.msra.mxu0 0.0
        %745 = vmatprep.subr.mxu0 0.0
        %746 = vmatpush1.msra.mxu0 0.0
        %747 = vmatprep.subr.mxu0 0.0
        %748 = vmatpush1.msra.mxu0 0.0
        %749 = vmatprep.mubr.f32.mxu0 0.0
        %v750 = vand.u32 %v308, 4294901760
        %751 = vmatmul.mubr.f32.gmra.mrb[0].mxu0 %v750
        %v752 = vpop.f32.mrb[0].mxu0
        %v753 = vadd.f32 %v681, %v752
        %v754 = vpop.f32.mrb[0].mxu0
        %755 = vdwg.mxu0
        %vm756 = vcmask 57344
        %v757 = vsel %vm756, %v305, 0.0
        %758 = vadd.xlane.f32.xlu0 %v757
        %v759 = vpop.xlane.xlu0 %758
        %v760 = vmax.f32 %v759, 1e-09
        %v761 = vld [vmem:[#allocation2] sm:$0x1]
        %v762 = vrcp.pop %v760
        %v763 = vmul.f32 %v753, %v762
        %v764 = vadd.f32 %v761, %v763
        %vm765 = vcmask 253952
        %766 = vst.msk [vmem:[#allocation2] sm:$0x1] %vm765, %v764
        %p767 = scmp.eq.s32.totalorder %s26, 2
        // Predicated region
        $region53: #{tpu_custom_call.1} parent=35 // pred_check
          %p768 = pneg %p767
        $region54: #{tpu_custom_call.1} parent=35 // pred_check_branch
          %770 = sbr.rel (%p768) target = $region56
        $region55: #{tpu_custom_call.1} parent=35 // pred_region
          %v771 = vld [vmem:[#allocation2] sm:$0x1]
          %v772 = vmul.f32 %v771, 0.33333334
          %v773 = vld [vmem:[#allocation7] sm:$0xff]
          %v775 = vsel %vm306, 1.0, 0
          %777 = vmatprep.subr.mxu0 0.0
          %v778 = vand.u32 %v773, 4294901760
          %779 = vmatpush1.msra.mxu0 %v778
          %780 = vmatprep.subr.mxu0 0.0
          %781 = vmatpush1.msra.mxu0 0.0
          %782 = vmatprep.subr.mxu0 0.0
          %783 = vmatpush1.msra.mxu0 0.0
          %784 = vmatprep.subr.mxu0 0.0
          %785 = vmatpush1.msra.mxu0 0.0
          %786 = vmatprep.subr.mxu0 0.0
          %787 = vmatpush1.msra.mxu0 0.0
          %788 = vmatprep.subr.mxu0 0.0
          %789 = vmatpush1.msra.mxu0 0.0
          %790 = vmatprep.subr.mxu0 0.0
          %791 = vmatpush1.msra.mxu0 0.0
          %792 = vmatprep.subr.mxu0 0.0
          %793 = vmatpush1.msra.mxu0 0.0
          %794 = vmatprep.subr.mxu0 0.0
          %795 = vmatpush1.msra.mxu0 0.0
          %796 = vmatprep.subr.mxu0 0.0
          %797 = vmatpush1.msra.mxu0 0.0
          %798 = vmatprep.subr.mxu0 0.0
          %799 = vmatpush1.msra.mxu0 0.0
          %800 = vmatprep.subr.mxu0 0.0
          %801 = vmatpush1.msra.mxu0 0.0
          %802 = vmatprep.subr.mxu0 0.0
          %803 = vmatpush1.msra.mxu0 0.0
          %804 = vmatprep.subr.mxu0 0.0
          %805 = vmatpush1.msra.mxu0 0.0
          %806 = vmatprep.subr.mxu0 0.0
          %807 = vmatpush1.msra.mxu0 0.0
          %808 = vmatprep.subr.mxu0 0.0
          %809 = vmatpush1.msra.mxu0 0.0
          %810 = vmatprep.subr.mxu0 0.0
          %811 = vmatpush1.msra.mxu0 0.0
          %812 = vmatprep.subr.mxu0 0.0
          %813 = vmatpush1.msra.mxu0 0.0
          %814 = vmatprep.subr.mxu0 0.0
          %815 = vmatpush1.msra.mxu0 0.0
          %816 = vmatprep.subr.mxu0 0.0
          %817 = vmatpush1.msra.mxu0 0.0
          %818 = vmatprep.subr.mxu0 0.0
          %819 = vmatpush1.msra.mxu0 0.0
          %820 = vmatprep.subr.mxu0 0.0
          %821 = vmatpush1.msra.mxu0 0.0
          %822 = vmatprep.subr.mxu0 0.0
          %823 = vmatpush1.msra.mxu0 0.0
          %824 = vmatprep.subr.mxu0 0.0
          %825 = vmatpush1.msra.mxu0 0.0
          %826 = vmatprep.subr.mxu0 0.0
          %827 = vmatpush1.msra.mxu0 0.0
          %828 = vmatprep.subr.mxu0 0.0
          %829 = vmatpush1.msra.mxu0 0.0
          %830 = vmatprep.subr.mxu0 0.0
          %831 = vmatpush1.msra.mxu0 0.0
          %832 = vmatprep.subr.mxu0 0.0
          %833 = vmatpush1.msra.mxu0 0.0
          %834 = vmatprep.subr.mxu0 0.0
          %835 = vmatpush1.msra.mxu0 0.0
          %836 = vmatprep.subr.mxu0 0.0
          %837 = vmatpush1.msra.mxu0 0.0
          %838 = vmatprep.subr.mxu0 0.0
          %839 = vmatpush1.msra.mxu0 0.0
          %840 = vmatprep.subr.mxu0 0.0
          %841 = vmatpush1.msra.mxu0 0.0
          %842 = vmatprep.mubr.f32.mxu0 0.0
          %v843 = vand.u32 %v775, 4294901760
          %v844 = vsub.f32 %v775, %v843
          %v845 = vand.u32 %v844, 4294901760
          %v846 = vsub.f32 %v844, %v845
          %v847 = vand.u32 %v846, 4294901760
          %848 = vmatmul.mubr.f32.gmra.mrb[0].mxu0 %v847
          %v849 = vpop.f32.mrb[0].mxu0
          %v850 = vadd.f32 0.0, %v849
          %v851 = vpop.f32.mrb[0].mxu0
          %852 = vdwg.mxu0
          %853 = vmatprep.subr.mxu0 0.0
          %v854 = vand.u32 %v773, 4294901760
          %v855 = vsub.f32 %v773, %v854
          %v856 = vand.u32 %v855, 4294901760
          %v857 = vsub.f32 %v855, %v856
          %v858 = vand.u32 %v857, 4294901760
          %859 = vmatpush1.msra.mxu0 %v858
          %860 = vmatprep.subr.mxu0 0.0
          %861 = vmatpush1.msra.mxu0 0.0
          %862 = vmatprep.subr.mxu0 0.0
          %863 = vmatpush1.msra.mxu0 0.0
          %864 = vmatprep.subr.mxu0 0.0
          %865 = vmatpush1.msra.mxu0 0.0
          %866 = vmatprep.subr.mxu0 0.0
          %867 = vmatpush1.msra.mxu0 0.0
          %868 = vmatprep.subr.mxu0 0.0
          %869 = vmatpush1.msra.mxu0 0.0
          %870 = vmatprep.subr.mxu0 0.0
          %871 = vmatpush1.msra.mxu0 0.0
          %872 = vmatprep.subr.mxu0 0.0
          %873 = vmatpush1.msra.mxu0 0.0
          %874 = vmatprep.subr.mxu0 0.0
          %875 = vmatpush1.msra.mxu0 0.0
          %876 = vmatprep.subr.mxu0 0.0
          %877 = vmatpush1.msra.mxu0 0.0
          %878 = vmatprep.subr.mxu0 0.0
          %879 = vmatpush1.msra.mxu0 0.0
          %880 = vmatprep.subr.mxu0 0.0
          %881 = vmatpush1.msra.mxu0 0.0
          %882 = vmatprep.subr.mxu0 0.0
          %883 = vmatpush1.msra.mxu0 0.0
          %884 = vmatprep.subr.mxu0 0.0
          %885 = vmatpush1.msra.mxu0 0.0
          %886 = vmatprep.subr.mxu0 0.0
          %887 = vmatpush1.msra.mxu0 0.0
          %888 = vmatprep.subr.mxu0 0.0
          %889 = vmatpush1.msra.mxu0 0.0
          %890 = vmatprep.subr.mxu0 0.0
          %891 = vmatpush1.msra.mxu0 0.0
          %892 = vmatprep.subr.mxu0 0.0
          %893 = vmatpush1.msra.mxu0 0.0
          %894 = vmatprep.subr.mxu0 0.0
          %895 = vmatpush1.msra.mxu0 0.0
          %896 = vmatprep.subr.mxu0 0.0
          %897 = vmatpush1.msra.mxu0 0.0
          %898 = vmatprep.subr.mxu0 0.0
          %899 = vmatpush1.msra.mxu0 0.0
          %900 = vmatprep.subr.mxu0 0.0
          %901 = vmatpush1.msra.mxu0 0.0
          %902 = vmatprep.subr.mxu0 0.0
          %903 = vmatpush1.msra.mxu0 0.0
          %904 = vmatprep.subr.mxu0 0.0
          %905 = vmatpush1.msra.mxu0 0.0
          %906 = vmatprep.subr.mxu0 0.0
          %907 = vmatpush1.msra.mxu0 0.0
          %908 = vmatprep.subr.mxu0 0.0
          %909 = vmatpush1.msra.mxu0 0.0
          %910 = vmatprep.subr.mxu0 0.0
          %911 = vmatpush1.msra.mxu0 0.0
          %912 = vmatprep.subr.mxu0 0.0
          %913 = vmatpush1.msra.mxu0 0.0
          %914 = vmatprep.subr.mxu0 0.0
          %915 = vmatpush1.msra.mxu0 0.0
          %916 = vmatprep.subr.mxu0 0.0
          %917 = vmatpush1.msra.mxu0 0.0
          %918 = vmatprep.subr.mxu0 0.0
          %919 = vmatpush1.msra.mxu0 0.0
          %920 = vmatprep.subr.mxu0 0.0
          %921 = vmatpush1.msra.mxu0 0.0
          %922 = vmatprep.mubr.f32.mxu0 0.0
          %v923 = vand.u32 %v775, 4294901760
          %924 = vmatmul.mubr.f32.gmra.mrb[0].mxu0 %v923
          %v925 = vpop.f32.mrb[0].mxu0
          %v926 = vadd.f32 %v850, %v925
          %v927 = vpop.f32.mrb[0].mxu0
          %928 = vdwg.mxu0
          %929 = vmatprep.subr.mxu0 0.0
          %v930 = vand.u32 %v773, 4294901760
          %v931 = vsub.f32 %v773, %v930
          %932 = vmatpush1.msra.mxu0 %v931
          %933 = vmatprep.subr.mxu0 0.0
          %934 = vmatpush1.msra.mxu0 0.0
          %935 = vmatprep.subr.mxu0 0.0
          %936 = vmatpush1.msra.mxu0 0.0
          %937 = vmatprep.subr.mxu0 0.0
          %938 = vmatpush1.msra.mxu0 0.0
          %939 = vmatprep.subr.mxu0 0.0
          %940 = vmatpush1.msra.mxu0 0.0
          %941 = vmatprep.subr.mxu0 0.0
          %942 = vmatpush1.msra.mxu0 0.0
          %943 = vmatprep.subr.mxu0 0.0
          %944 = vmatpush1.msra.mxu0 0.0
          %945 = vmatprep.subr.mxu0 0.0
          %946 = vmatpush1.msra.mxu0 0.0
          %947 = vmatprep.subr.mxu0 0.0
          %948 = vmatpush1.msra.mxu0 0.0
          %949 = vmatprep.subr.mxu0 0.0
          %950 = vmatpush1.msra.mxu0 0.0
          %951 = vmatprep.subr.mxu0 0.0
          %952 = vmatpush1.msra.mxu0 0.0
          %953 = vmatprep.subr.mxu0 0.0
          %954 = vmatpush1.msra.mxu0 0.0
          %955 = vmatprep.subr.mxu0 0.0
          %956 = vmatpush1.msra.mxu0 0.0
          %957 = vmatprep.subr.mxu0 0.0
          %958 = vmatpush1.msra.mxu0 0.0
          %959 = vmatprep.subr.mxu0 0.0
          %960 = vmatpush1.msra.mxu0 0.0
          %961 = vmatprep.subr.mxu0 0.0
          %962 = vmatpush1.msra.mxu0 0.0
          %963 = vmatprep.subr.mxu0 0.0
          %964 = vmatpush1.msra.mxu0 0.0
          %965 = vmatprep.subr.mxu0 0.0
          %966 = vmatpush1.msra.mxu0 0.0
          %967 = vmatprep.subr.mxu0 0.0
          %968 = vmatpush1.msra.mxu0 0.0
          %969 = vmatprep.subr.mxu0 0.0
          %970 = vmatpush1.msra.mxu0 0.0
          %971 = vmatprep.subr.mxu0 0.0
          %972 = vmatpush1.msra.mxu0 0.0
          %973 = vmatprep.subr.mxu0 0.0
          %974 = vmatpush1.msra.mxu0 0.0
          %975 = vmatprep.subr.mxu0 0.0
          %976 = vmatpush1.msra.mxu0 0.0
          %977 = vmatprep.subr.mxu0 0.0
          %978 = vmatpush1.msra.mxu0 0.0
          %979 = vmatprep.subr.mxu0 0.0
          %980 = vmatpush1.msra.mxu0 0.0
          %981 = vmatprep.subr.mxu0 0.0
          %982 = vmatpush1.msra.mxu0 0.0
          %983 = vmatprep.subr.mxu0 0.0
          %984 = vmatpush1.msra.mxu0 0.0
          %985 = vmatprep.subr.mxu0 0.0
          %986 = vmatpush1.msra.mxu0 0.0
          %987 = vmatprep.subr.mxu0 0.0
          %988 = vmatpush1.msra.mxu0 0.0
          %989 = vmatprep.subr.mxu0 0.0
          %990 = vmatpush1.msra.mxu0 0.0
          %991 = vmatprep.subr.mxu0 0.0
          %992 = vmatpush1.msra.mxu0 0.0
          %993 = vmatprep.subr.mxu0 0.0
          %994 = vmatpush1.msra.mxu0 0.0
          %995 = vmatprep.mubr.f32.mxu0 0.0
          %v996 = vand.u32 %v775, 4294901760
          %v997 = vsub.f32 %v775, %v996
          %998 = vmatmul.mubr.f32.gmra.mrb[0].mxu0 %v997
          %v999 = vpop.f32.mrb[0].mxu0
          %v1000 = vadd.f32 %v926, %v999
          %v1001 = vpop.f32.mrb[0].mxu0
          %1002 = vdwg.mxu0
          %1003 = vmatprep.subr.mxu0 0.0
          %v1004 = vand.u32 %v773, 4294901760
          %1005 = vmatpush1.msra.mxu0 %v1004
          %1006 = vmatprep.subr.mxu0 0.0
          %1007 = vmatpush1.msra.mxu0 0.0
          %1008 = vmatprep.subr.mxu0 0.0
          %1009 = vmatpush1.msra.mxu0 0.0
          %1010 = vmatprep.subr.mxu0 0.0
          %1011 = vmatpush1.msra.mxu0 0.0
          %1012 = vmatprep.subr.mxu0 0.0
          %1013 = vmatpush1.msra.mxu0 0.0
          %1014 = vmatprep.subr.mxu0 0.0
          %1015 = vmatpush1.msra.mxu0 0.0
          %1016 = vmatprep.subr.mxu0 0.0
          %1017 = vmatpush1.msra.mxu0 0.0
          %1018 = vmatprep.subr.mxu0 0.0
          %1019 = vmatpush1.msra.mxu0 0.0
          %1020 = vmatprep.subr.mxu0 0.0
          %1021 = vmatpush1.msra.mxu0 0.0
          %1022 = vmatprep.subr.mxu0 0.0
          %1023 = vmatpush1.msra.mxu0 0.0
          %1024 = vmatprep.subr.mxu0 0.0
          %1025 = vmatpush1.msra.mxu0 0.0
          %1026 = vmatprep.subr.mxu0 0.0
          %1027 = vmatpush1.msra.mxu0 0.0
          %1028 = vmatprep.subr.mxu0 0.0
          %1029 = vmatpush1.msra.mxu0 0.0
          %1030 = vmatprep.subr.mxu0 0.0
          %1031 = vmatpush1.msra.mxu0 0.0
          %1032 = vmatprep.subr.mxu0 0.0
          %1033 = vmatpush1.msra.mxu0 0.0
          %1034 = vmatprep.subr.mxu0 0.0
          %1035 = vmatpush1.msra.mxu0 0.0
          %1036 = vmatprep.subr.mxu0 0.0
          %1037 = vmatpush1.msra.mxu0 0.0
          %1038 = vmatprep.subr.mxu0 0.0
          %1039 = vmatpush1.msra.mxu0 0.0
          %1040 = vmatprep.subr.mxu0 0.0
          %1041 = vmatpush1.msra.mxu0 0.0
          %1042 = vmatprep.subr.mxu0 0.0
          %1043 = vmatpush1.msra.mxu0 0.0
          %1044 = vmatprep.subr.mxu0 0.0
          %1045 = vmatpush1.msra.mxu0 0.0
          %1046 = vmatprep.subr.mxu0 0.0
          %1047 = vmatpush1.msra.mxu0 0.0
          %1048 = vmatprep.subr.mxu0 0.0
          %1049 = vmatpush1.msra.mxu0 0.0
          %1050 = vmatprep.subr.mxu0 0.0
          %1051 = vmatpush1.msra.mxu0 0.0
          %1052 = vmatprep.subr.mxu0 0.0
          %1053 = vmatpush1.msra.mxu0 0.0
          %1054 = vmatprep.subr.mxu0 0.0
          %1055 = vmatpush1.msra.mxu0 0.0
          %1056 = vmatprep.subr.mxu0 0.0
          %1057 = vmatpush1.msra.mxu0 0.0
          %1058 = vmatprep.subr.mxu0 0.0
          %1059 = vmatpush1.msra.mxu0 0.0
          %1060 = vmatprep.subr.mxu0 0.0
          %1061 = vmatpush1.msra.mxu0 0.0
          %1062 = vmatprep.subr.mxu0 0.0
          %1063 = vmatpush1.msra.mxu0 0.0
          %1064 = vmatprep.subr.mxu0 0.0
          %1065 = vmatpush1.msra.mxu0 0.0
          %1066 = vmatprep.subr.mxu0 0.0
          %1067 = vmatpush1.msra.mxu0 0.0
          %1068 = vmatprep.mubr.f32.mxu0 0.0
          %v1069 = vand.u32 %v775, 4294901760
          %v1070 = vsub.f32 %v775, %v1069
          %v1071 = vand.u32 %v1070, 4294901760
          %1072 = vmatmul.mubr.f32.gmra.mrb[0].mxu0 %v1071
          %v1073 = vpop.f32.mrb[0].mxu0
          %v1074 = vadd.f32 %v1000, %v1073
          %v1075 = vpop.f32.mrb[0].mxu0
          %1076 = vdwg.mxu0
          %1077 = vmatprep.subr.mxu0 0.0
          %v1078 = vand.u32 %v773, 4294901760
          %v1079 = vsub.f32 %v773, %v1078
          %v1080 = vand.u32 %v1079, 4294901760
          %1081 = vmatpush1.msra.mxu0 %v1080
          %1082 = vmatprep.subr.mxu0 0.0
          %1083 = vmatpush1.msra.mxu0 0.0
          %1084 = vmatprep.subr.mxu0 0.0
          %1085 = vmatpush1.msra.mxu0 0.0
          %1086 = vmatprep.subr.mxu0 0.0
          %1087 = vmatpush1.msra.mxu0 0.0
          %1088 = vmatprep.subr.mxu0 0.0
          %1089 = vmatpush1.msra.mxu0 0.0
          %1090 = vmatprep.subr.mxu0 0.0
          %1091 = vmatpush1.msra.mxu0 0.0
          %1092 = vmatprep.subr.mxu0 0.0
          %1093 = vmatpush1.msra.mxu0 0.0
          %1094 = vmatprep.subr.mxu0 0.0
          %1095 = vmatpush1.msra.mxu0 0.0
          %1096 = vmatprep.subr.mxu0 0.0
          %1097 = vmatpush1.msra.mxu0 0.0
          %1098 = vmatprep.subr.mxu0 0.0
          %1099 = vmatpush1.msra.mxu0 0.0
          %1100 = vmatprep.subr.mxu0 0.0
          %1101 = vmatpush1.msra.mxu0 0.0
          %1102 = vmatprep.subr.mxu0 0.0
          %1103 = vmatpush1.msra.mxu0 0.0
          %1104 = vmatprep.subr.mxu0 0.0
          %1105 = vmatpush1.msra.mxu0 0.0
          %1106 = vmatprep.subr.mxu0 0.0
          %1107 = vmatpush1.msra.mxu0 0.0
          %1108 = vmatprep.subr.mxu0 0.0
          %1109 = vmatpush1.msra.mxu0 0.0
          %1110 = vmatprep.subr.mxu0 0.0
          %1111 = vmatpush1.msra.mxu0 0.0
          %1112 = vmatprep.subr.mxu0 0.0
          %1113 = vmatpush1.msra.mxu0 0.0
          %1114 = vmatprep.subr.mxu0 0.0
          %1115 = vmatpush1.msra.mxu0 0.0
          %1116 = vmatprep.subr.mxu0 0.0
          %1117 = vmatpush1.msra.mxu0 0.0
          %1118 = vmatprep.subr.mxu0 0.0
          %1119 = vmatpush1.msra.mxu0 0.0
          %1120 = vmatprep.subr.mxu0 0.0
          %1121 = vmatpush1.msra.mxu0 0.0
          %1122 = vmatprep.subr.mxu0 0.0
          %1123 = vmatpush1.msra.mxu0 0.0
          %1124 = vmatprep.subr.mxu0 0.0
          %1125 = vmatpush1.msra.mxu0 0.0
          %1126 = vmatprep.subr.mxu0 0.0
          %1127 = vmatpush1.msra.mxu0 0.0
          %1128 = vmatprep.subr.mxu0 0.0
          %1129 = vmatpush1.msra.mxu0 0.0
          %1130 = vmatprep.subr.mxu0 0.0
          %1131 = vmatpush1.msra.mxu0 0.0
          %1132 = vmatprep.subr.mxu0 0.0
          %1133 = vmatpush1.msra.mxu0 0.0
          %1134 = vmatprep.subr.mxu0 0.0
          %1135 = vmatpush1.msra.mxu0 0.0
          %1136 = vmatprep.subr.mxu0 0.0
          %1137 = vmatpush1.msra.mxu0 0.0
          %1138 = vmatprep.subr.mxu0 0.0
          %1139 = vmatpush1.msra.mxu0 0.0
          %1140 = vmatprep.subr.mxu0 0.0
          %1141 = vmatpush1.msra.mxu0 0.0
          %1142 = vmatprep.subr.mxu0 0.0
          %1143 = vmatpush1.msra.mxu0 0.0
          %1144 = vmatprep.mubr.f32.mxu0 0.0
          %v1145 = vand.u32 %v775, 4294901760
          %1146 = vmatmul.mubr.f32.gmra.mrb[0].mxu0 %v1145
          %v1147 = vpop.f32.mrb[0].mxu0
          %v1148 = vadd.f32 %v1074, %v1147
          %v1149 = vpop.f32.mrb[0].mxu0
          %1150 = vdwg.mxu0
          %1151 = vmatprep.subr.mxu0 0.0
          %v1152 = vand.u32 %v773, 4294901760
          %1153 = vmatpush1.msra.mxu0 %v1152
          %1154 = vmatprep.subr.mxu0 0.0
          %1155 = vmatpush1.msra.mxu0 0.0
          %1156 = vmatprep.subr.mxu0 0.0
          %1157 = vmatpush1.msra.mxu0 0.0
          %1158 = vmatprep.subr.mxu0 0.0
          %1159 = vmatpush1.msra.mxu0 0.0
          %1160 = vmatprep.subr.mxu0 0.0
          %1161 = vmatpush1.msra.mxu0 0.0
          %1162 = vmatprep.subr.mxu0 0.0
          %1163 = vmatpush1.msra.mxu0 0.0
          %1164 = vmatprep.subr.mxu0 0.0
          %1165 = vmatpush1.msra.mxu0 0.0
          %1166 = vmatprep.subr.mxu0 0.0
          %1167 = vmatpush1.msra.mxu0 0.0
          %1168 = vmatprep.subr.mxu0 0.0
          %1169 = vmatpush1.msra.mxu0 0.0
          %1170 = vmatprep.subr.mxu0 0.0
          %1171 = vmatpush1.msra.mxu0 0.0
          %1172 = vmatprep.subr.mxu0 0.0
          %1173 = vmatpush1.msra.mxu0 0.0
          %1174 = vmatprep.subr.mxu0 0.0
          %1175 = vmatpush1.msra.mxu0 0.0
          %1176 = vmatprep.subr.mxu0 0.0
          %1177 = vmatpush1.msra.mxu0 0.0
          %1178 = vmatprep.subr.mxu0 0.0
          %1179 = vmatpush1.msra.mxu0 0.0
          %1180 = vmatprep.subr.mxu0 0.0
          %1181 = vmatpush1.msra.mxu0 0.0
          %1182 = vmatprep.subr.mxu0 0.0
          %1183 = vmatpush1.msra.mxu0 0.0
          %1184 = vmatprep.subr.mxu0 0.0
          %1185 = vmatpush1.msra.mxu0 0.0
          %1186 = vmatprep.subr.mxu0 0.0
          %1187 = vmatpush1.msra.mxu0 0.0
          %1188 = vmatprep.subr.mxu0 0.0
          %1189 = vmatpush1.msra.mxu0 0.0
          %1190 = vmatprep.subr.mxu0 0.0
          %1191 = vmatpush1.msra.mxu0 0.0
          %1192 = vmatprep.subr.mxu0 0.0
          %1193 = vmatpush1.msra.mxu0 0.0
          %1194 = vmatprep.subr.mxu0 0.0
          %1195 = vmatpush1.msra.mxu0 0.0
          %1196 = vmatprep.subr.mxu0 0.0
          %1197 = vmatpush1.msra.mxu0 0.0
          %1198 = vmatprep.subr.mxu0 0.0
          %1199 = vmatpush1.msra.mxu0 0.0
          %1200 = vmatprep.subr.mxu0 0.0
          %1201 = vmatpush1.msra.mxu0 0.0
          %1202 = vmatprep.subr.mxu0 0.0
          %1203 = vmatpush1.msra.mxu0 0.0
          %1204 = vmatprep.subr.mxu0 0.0
          %1205 = vmatpush1.msra.mxu0 0.0
          %1206 = vmatprep.subr.mxu0 0.0
          %1207 = vmatpush1.msra.mxu0 0.0
          %1208 = vmatprep.subr.mxu0 0.0
          %1209 = vmatpush1.msra.mxu0 0.0
          %1210 = vmatprep.subr.mxu0 0.0
          %1211 = vmatpush1.msra.mxu0 0.0
          %1212 = vmatprep.subr.mxu0 0.0
          %1213 = vmatpush1.msra.mxu0 0.0
          %1214 = vmatprep.subr.mxu0 0.0
          %1215 = vmatpush1.msra.mxu0 0.0
          %1216 = vmatprep.mubr.f32.mxu0 0.0
          %v1217 = vand.u32 %v775, 4294901760
          %1218 = vmatmul.mubr.f32.gmra.mrb[0].mxu0 %v1217
          %v1219 = vpop.f32.mrb[0].mxu0
          %v1220 = vadd.f32 %v1148, %v1219
          %v1221 = vpop.f32.mrb[0].mxu0
          %1222 = vdwg.mxu0
          %v1223 = vld [vmem:[%s294] sm:$0x1]
          %v1224 = vsel %vm756, %v1223, 0.0
          %1225 = vadd.xlane.f32.xlu0 %v1224
          %v1226 = vpop.xlane.xlu0 %1225
          %v1227 = vrcp.pop %v1226
          %v1228 = vmul.f32 %v1220, %v1227
          %v1229 = vsub.f32 %v772, %v1228
          %v1230 = vmax.f32 %v1229, 0.0
          %v1231 = vmul.f32 %v1230, %v1230
          %v1232 = vsel %vm765, %v1231, 0.0
          %1233 = vadd.xlane.f32.xlu0 %v1232
          %v1234 = vpop.xlane.xlu0 %1233
          %vm1235 = vcmask 0
          %1236 = vst.msk [vmem:[%s297] sm:$0x1] %vm1235, %v1234
        $region56: #{tpu_custom_call.1} parent=35 // pred_fallthru
          _
        %p1237 = scmp.lt.s32.totalorder %s25, 1
        %s1238 = scalar_select %p1237, %s25, 1
        %s1239 = scalar_lea.vmem %s4, %s1238
        // Predicated region
        $region57: #{tpu_custom_call.1} parent=35 // pred_check
          %p1240 = pneg %p159
        $region58: #{tpu_custom_call.1} parent=35 // pred_check_branch
          %1242 = sbr.rel (%p1240) target = $region60
        $region59: #{tpu_custom_call.1} parent=35 // pred_region
          _
        $region60: #{tpu_custom_call.1} parent=35 // pred_fallthru
          _
      $region36: #{tpu_custom_call.1} parent=5 // pred_fallthru
        _
      %p1243 = scmp.le.s32.totalorder 2, %s16
      // Predicated region
      $region61: #{tpu_custom_call.1} parent=5 // pred_check
        %p1244 = pneg %p1243
      $region62: #{tpu_custom_call.1} parent=5 // pred_check_branch
        %1246 = sbr.rel (%p1244) target = $region64
      $region63: #{tpu_custom_call.1} parent=5 // pred_region
        %s1247 = ssub.s32 %s16, 2
        // Predicated region
        $region65: #{tpu_custom_call.1} parent=63 // pred_check
          %p1248 = pneg %p165
        $region66: #{tpu_custom_call.1} parent=63 // pred_check_branch
          %1250 = sbr.rel (%p1248) target = $region68
        $region67: #{tpu_custom_call.1} parent=63 // pred_region
          %p1251 = scmp.lt.s32.totalorder %s27, 1
          %s1252 = scalar_select %p1251, %s27, 1
          %s1253 = scalar_lea.vmem %s4, %s1252
        $region68: #{tpu_custom_call.1} parent=63 // pred_fallthru
          _
      $region64: #{tpu_custom_call.1} parent=5 // pred_fallthru
        _
    $region6: #{tpu_custom_call.1} parent=1 // loop_footer
      %s20 = sadd.s32 1, %s16
    $region7: #{tpu_custom_call.1} parent=1 // loop_footer_branch
      %15 = sbr.rel target = $region3
    $region8: #{tpu_custom_call.1} parent=1 // loop_exit
      _
    %1254 = vsyncpa [#allocation4], 1
    %s1255 = scalar_lea.sflag [#allocation4], 1
    %1256 = vsyncpa %s1255, 1
    %1257 = vsyncpa [#allocation6], 1
    %s1258 = scalar_lea.sflag [#allocation6], 1
    %1259 = vsyncpa %s1258, 1

// kernel: tpu_custom_call.1
$region0: #{tpu_custom_call.1}
  #allocation0 [shape = 'u32[]', space=smem, size = 0x4, offset = 0x4, fixed_abs, tag = 'smem constant byte address 0x4 - core index']
  #allocation1 [shape = 'u32[144,128]{1,0:T(1,128)}', space=vmem, size = 0x12000, scoped, tag = 'internal scratch']
  #allocation2 [shape = 'f32[1,1,32]{2,1,0:T(1,128)}', space=vmem, size = 0x200, scoped, tag = 'scratch operand']
  %s0 = inlined_call_operand.hbm [shape: f32[2,3,8,32], index: 0, kind: input, shape index: {}]
  %s1 = inlined_call_operand.hbm [shape: f32[2,3,1,8], index: 1, kind: input, shape index: {}]
  %s2 = inlined_call_operand.hbm [shape: f32[2,8,32], index: 2, kind: input, shape index: {}]
  %s3 = inlined_call_operand.vmem [shape: f32[2,1,8], index: 3, kind: input, shape index: {}]
  %s4 = inlined_call_operand.vmem [shape: f32[2,1,1], index: 4, kind: output, shape index: {}]
  %s5 = sld [smem:[#allocation0]]
  $region69: #{tpu_custom_call.1} parent=0
    _
  %s7 = ssub.s32 1, %s5
  %s8 = scalar_select 0, %s7, %s5
  $region1: #{tpu_custom_call.1} parent=0
    #allocation3 [shape = 'u8[8192]{0}', space=vmem, size = 0x2000, scoped, tag = 'input window, operand 0']
    #allocation4 [shape = 's32[2]{0}', space=sflag, size = 0x8, scoped, tag = 'scoped memory for tpu_custom_call.1']
    #allocation5 [shape = 'u8[1024]{0}', space=vmem, size = 0x400, scoped, tag = 'input window, operand 1']
    #allocation6 [shape = 's32[2]{0}', space=sflag, size = 0x8, scoped, tag = 'scoped memory for tpu_custom_call.1']
    #allocation7 [shape = 'u8[8192]{0}', space=vmem, size = 0x2000, scoped, tag = 'input window, operand 2']
    %9 = vsyncpa [#allocation4], 0
    %s10 = scalar_lea.sflag [#allocation4], 1
    %11 = vsyncpa %s10, 0
    %12 = vsyncpa [#allocation6], 0
    %s13 = scalar_lea.sflag [#allocation6], 1
    %14 = vsyncpa %s13, 0
    loop: start=0, step=1, limit=8
    $region2: #{tpu_custom_call.1} parent=1 // loop_pre_header
      _
    $region3: #{tpu_custom_call.1} parent=1 // loop_header
      %s16 = sphi 0, %s20
      %p17 = scmp.ge.s32.totalorder %s16, 8
      %s23 = sphi 0, %s35
      %s24 = sphi 0, %s31
      %s25 = sphi 0, %s23
      %s26 = sphi 0, %s24
      %s27 = sphi 0, %s25
      %s28 = sphi 0, %s26
      %s40 = sphi 0, %s42
      %s43 = sphi 0, %s40
      %s44 = sphi 0, %s43
      %s60 = sphi 0, %s44
      %s68 = sphi 0, %s70
      %s71 = sphi 0, %s68
      %s72 = sphi 0, %s71
      %s88 = sphi 0, %s72
      %s94 = sphi 0, %s96
      %s97 = sphi 0, %s94
      %s98 = sphi 0, %s97
      %s114 = sphi 0, %s98
      %s120 = sphi 0, %s122
      %s123 = sphi 0, %s120
      %s124 = sphi 0, %s123
      %s140 = sphi 0, %s124
      %s146 = sphi 0, %s148
      %s149 = sphi 0, %s146
      %s150 = sphi 0, %s149
      %s166 = sphi 0, %s150
    $region4: #{tpu_custom_call.1} parent=1 // loop_header_branch
      %19 = sbr.rel (%p17) target = $region8
    $region5: #{tpu_custom_call.1} parent=1 // loop_body
      %s21 = ssub.s32 %s16, 1
      %s22 = ssub.s32 %s16, 2
      %s29 = sadd.s32 1, %s24
      %p30 = scmp.ge.s32.totalorder %s29, 3
      %s31 = scalar_select %p30, 0, %s29
      %s32 = sadd.s32 1, %s23
      %s33 = scalar_select %p30, %s32, %s23
      %p34 = scmp.ge.s32.totalorder %s33, 2
      %s35 = scalar_select %p34, 0, %s33
      %s36 = ssub.s32 %s23, %s35
      %s37 = ssub.s32 %s24, %s31
      %s38 = sor.u32 %s36, %s37
      %p39 = scmp.eq.s32.totalorder %s38, 0
      %s41 = sadd.s32 %s40, 1
      %s42 = scalar_select %p39, %s40, %s41
      %p45 = pneg %p39
      %p46 = scmp.eq.s32.totalorder %s16, 5
      %p47 = por %p45, %p46
      %p48 = scmp.ne.s32.totalorder %s40, %s43
      %p49 = scmp.eq.s32.totalorder %s16, 0
      %p50 = por %p48, %p49
      %p51 = scmp.ne.s32.totalorder %s40, %s43
      %p52 = scmp.eq.s32.totalorder %s21, 5
      %p53 = por %p51, %p52
      %p54 = scmp.ne.s32.totalorder %s43, %s44
      %p55 = scmp.eq.s32.totalorder %s21, 0
      %p56 = por %p54, %p55
      %p57 = scmp.ne.s32.totalorder %s43, %s44
      %p58 = scmp.eq.s32.totalorder %s22, 5
      %p59 = por %p57, %p58
      %p61 = scmp.ne.s32.totalorder %s44, %s60
      %p62 = scmp.eq.s32.totalorder %s22, 0
      %p63 = por %p61, %p62
      %s64 = ssub.s32 %s23, %s35
      %s65 = ssub.s32 %s24, %s31
      %s66 = sor.u32 %s64, %s65
      %p67 = scmp.eq.s32.totalorder %s66, 0
      %s69 = sadd.s32 %s68, 1
      %s70 = scalar_select %p67, %s68, %s69
      %p73 = pneg %p67
      %p74 = scmp.eq.s32.totalorder %s16, 5
      %p75 = por %p73, %p74
      %p76 = scmp.ne.s32.totalorder %s68, %s71
      %p77 = scmp.eq.s32.totalorder %s16, 0
      %p78 = por %p76, %p77
      %p79 = scmp.ne.s32.totalorder %s68, %s71
      %p80 = scmp.eq.s32.totalorder %s21, 5
      %p81 = por %p79, %p80
      %p82 = scmp.ne.s32.totalorder %s71, %s72
      %p83 = scmp.eq.s32.totalorder %s21, 0
      %p84 = por %p82, %p83
      %p85 = scmp.ne.s32.totalorder %s71, %s72
      %p86 = scmp.eq.s32.totalorder %s22, 5
      %p87 = por %p85, %p86
      %p89 = scmp.ne.s32.totalorder %s72, %s88
      %p90 = scmp.eq.s32.totalorder %s22, 0
      %p91 = por %p89, %p90
      %s92 = ssub.s32 %s23, %s35
      %p93 = scmp.eq.s32.totalorder %s92, 0
      %s95 = sadd.s32 %s94, 1
      %s96 = scalar_select %p93, %s94, %s95
      %p99 = pneg %p93
      %p100 = scmp.eq.s32.totalorder %s16, 5
      %p101 = por %p99, %p100
      %p102 = scmp.ne.s32.totalorder %s94, %s97
      %p103 = scmp.eq.s32.totalorder %s16, 0
      %p104 = por %p102, %p103
      %p105 = scmp.ne.s32.totalorder %s94, %s97
      %p106 = scmp.eq.s32.totalorder %s21, 5
      %p107 = por %p105, %p106
      %p108 = scmp.ne.s32.totalorder %s97, %s98
      %p109 = scmp.eq.s32.totalorder %s21, 0
      %p110 = por %p108, %p109
      %p111 = scmp.ne.s32.totalorder %s97, %s98
      %p112 = scmp.eq.s32.totalorder %s22, 5
      %p113 = por %p111, %p112
      %p115 = scmp.ne.s32.totalorder %s98, %s114
      %p116 = scmp.eq.s32.totalorder %s22, 0
      %p117 = por %p115, %p116
      %s118 = ssub.s32 %s23, %s35
      %p119 = scmp.eq.s32.totalorder %s118, 0
      %s121 = sadd.s32 %s120, 1
      %s122 = scalar_select %p119, %s120, %s121
      %p125 = pneg %p119
      %p126 = scmp.eq.s32.totalorder %s16, 5
      %p127 = por %p125, %p126
      %p128 = scmp.ne.s32.totalorder %s120, %s123
      %p129 = scmp.eq.s32.totalorder %s16, 0
      %p130 = por %p128, %p129
      %p131 = scmp.ne.s32.totalorder %s120, %s123
      %p132 = scmp.eq.s32.totalorder %s21, 5
      %p133 = por %p131, %p132
      %p134 = scmp.ne.s32.totalorder %s123, %s124
      %p135 = scmp.eq.s32.totalorder %s21, 0
      %p136 = por %p134, %p135
      %p137 = scmp.ne.s32.totalorder %s123, %s124
      %p138 = scmp.eq.s32.totalorder %s22, 5
      %p139 = por %p137, %p138
      %p141 = scmp.ne.s32.totalorder %s124, %s140
      %p142 = scmp.eq.s32.totalorder %s22, 0
      %p143 = por %p141, %p142
      %s144 = ssub.s32 %s23, %s35
      %p145 = scmp.eq.s32.totalorder %s144, 0
      %s147 = sadd.s32 %s146, 1
      %s148 = scalar_select %p145, %s146, %s147
      %p151 = pneg %p145
      %p152 = scmp.eq.s32.totalorder %s16, 5
      %p153 = por %p151, %p152
      %p154 = scmp.ne.s32.totalorder %s146, %s149
      %p155 = scmp.eq.s32.totalorder %s16, 0
      %p156 = por %p154, %p155
      %p157 = scmp.ne.s32.totalorder %s146, %s149
      %p158 = scmp.eq.s32.totalorder %s21, 5
      %p159 = por %p157, %p158
      %p160 = scmp.ne.s32.totalorder %s149, %s150
      %p161 = scmp.eq.s32.totalorder %s21, 0
      %p162 = por %p160, %p161
      %p163 = scmp.ne.s32.totalorder %s149, %s150
      %p164 = scmp.eq.s32.totalorder %s22, 5
      %p165 = por %p163, %p164
      %p167 = scmp.ne.s32.totalorder %s150, %s166
      %p168 = scmp.eq.s32.totalorder %s22, 0
      %p169 = por %p167, %p168
      %p170 = scmp.le.s32.totalorder 1, %s16
      %p171 = scmp.lt.s32.totalorder %s16, 7
      %p172 = pnand %p170, %p171
      %p173 = pneg %p172
      // Predicated region
      $region9: #{tpu_custom_call.1} parent=5 // pred_check
        _
      $region10: #{tpu_custom_call.1} parent=5 // pred_check_branch
        %175 = sbr.rel (%p172) target = $region12
      $region11: #{tpu_custom_call.1} parent=5 // pred_region
        %s176 = ssub.s32 %s16, 1
      $region12: #{tpu_custom_call.1} parent=5 // pred_fallthru
        _
      %p177 = scmp.lt.s32.totalorder %s16, 6
      // Predicated region
      $region13: #{tpu_custom_call.1} parent=5 // pred_check
        %p178 = pneg %p177
      $region14: #{tpu_custom_call.1} parent=5 // pred_check_branch
        %180 = sbr.rel (%p178) target = $region16
      $region15: #{tpu_custom_call.1} parent=5 // pred_region
        // Predicated region
        $region17: #{tpu_custom_call.1} parent=15 // pred_check
          %p181 = pneg %p50
        $region18: #{tpu_custom_call.1} parent=15 // pred_check_branch
          %183 = sbr.rel (%p181) target = $region20
        $region19: #{tpu_custom_call.1} parent=15 // pred_region
          %s184 = sand.u32 %s40, 1
          %s185 = scalar_lea.sflag [#allocation4], %s184
          %s186 = sand.u32 %s40, 1
          %s187 = smul.addr %s186, 8
          %s188 = scalar_lea.vmem [#allocation3], %s187
          %s190 = ssub.s32 128, 128
          %191 = vsyncadd %s185, %s190
          %s192 = smul.addr %s23, 3
          %s193 = sadd.s32 %s24, %s192
          %s194 = smul.addr %s193, 128
          %s195 = scalar_lea.hbm %s0, %s194
          %s197 = sshll.u32 %s188, 4
          %s198 = int_to_ptr.vmem [resolvable:$true] %s197
          %200 = dma.hbm_to_vmem [thread:$0]  %s195, 128, %s198, %s185
        $region20: #{tpu_custom_call.1} parent=15 // pred_fallthru
          _
        // Predicated region
        $region21: #{tpu_custom_call.1} parent=15 // pred_check
          %p201 = pneg %p78
        $region22: #{tpu_custom_call.1} parent=15 // pred_check_branch
          %203 = sbr.rel (%p201) target = $region24
        $region23: #{tpu_custom_call.1} parent=15 // pred_region
          %s204 = sand.u32 %s16, 1
          %s205 = scalar_lea.sflag [#allocation6], %s204
          %s206 = sand.u32 %s68, 1
          %s207 = scalar_lea.vmem [#allocation5], %s206
          %s209 = ssub.s32 16, 16
          %210 = vsyncadd %s205, %s209
          %s211 = smul.addr %s23, 3
          %s212 = sadd.s32 %s24, %s211
          %s213 = smul.addr %s212, 16
          %s214 = scalar_lea.hbm %s1, %s213
          %s216 = sshll.u32 %s207, 4
          %s217 = int_to_ptr.vmem [resolvable:$true] %s216
          %219 = dma.hbm_to_vmem [thread:$0]  %s214, 16, %s217, %s205
        $region24: #{tpu_custom_call.1} parent=15 // pred_fallthru
          _
        // Predicated region
        $region25: #{tpu_custom_call.1} parent=15 // pred_check
          %p220 = pneg %p104
        $region26: #{tpu_custom_call.1} parent=15 // pred_check_branch
          %222 = sbr.rel (%p220) target = $region28
        $region27: #{tpu_custom_call.1} parent=15 // pred_region
          %s223 = sand.u32 %s16, 1
          %s224 = scalar_lea.sflag [#allocation6], %s223
          %s225 = sand.u32 %s94, 1
          %s226 = smul.addr %s225, 8
          %s227 = scalar_lea.vmem [#allocation7], %s226
          %s229 = ssub.s32 128, 128
          %230 = vsyncadd %s224, %s229
          %s231 = smul.addr %s23, 128
          %s232 = scalar_lea.hbm %s2, %s231
          %s234 = sshll.u32 %s227, 4
          %s235 = int_to_ptr.vmem [resolvable:$true] %s234
          %237 = dma.hbm_to_vmem [thread:$0]  %s232, 128, %s235, %s224
        $region28: #{tpu_custom_call.1} parent=15 // pred_fallthru
          _
        // Predicated region
        $region29: #{tpu_custom_call.1} parent=15 // pred_check
          %p238 = pneg %p130
        $region30: #{tpu_custom_call.1} parent=15 // pred_check_branch
          %240 = sbr.rel (%p238) target = $region32
        $region31: #{tpu_custom_call.1} parent=15 // pred_region
          %p241 = scmp.lt.s32.totalorder %s23, 1
          %s242 = scalar_select %p241, %s23, 1
          %s243 = scalar_lea.vmem %s3, %s242
        $region32: #{tpu_custom_call.1} parent=15 // pred_fallthru
          _
      $region16: #{tpu_custom_call.1} parent=5 // pred_fallthru
        _
      %p244 = scmp.le.s32.totalorder 1, %s16
      %p245 = scmp.lt.s32.totalorder %s16, 7
      %p246 = pnand %p244, %p245
      %p247 = pneg %p246
      // Predicated region
      $region33: #{tpu_custom_call.1} parent=5 // pred_check
        _
      $region34: #{tpu_custom_call.1} parent=5 // pred_check_branch
        %249 = sbr.rel (%p246) target = $region36
      $region35: #{tpu_custom_call.1} parent=5 // pred_region
        %s250 = ssub.s32 %s16, 1
        %s251 = sand.u32 %s43, 1
        %s252 = scalar_lea.sflag [#allocation4], %s251
        %s253 = sand.u32 %s43, 1
        %s254 = smul.addr %s253, 8
        %s255 = scalar_lea.vmem [#allocation3], %s254
        // Predicated region
        $region37: #{tpu_custom_call.1} parent=35 // pred_check
          %p256 = pneg %p56
        $region38: #{tpu_custom_call.1} parent=35 // pred_check_branch
          %258 = sbr.rel (%p256) target = $region40
        $region39: #{tpu_custom_call.1} parent=35 // pred_region
          %259 = dma.done %s252, 128
        $region40: #{tpu_custom_call.1} parent=35 // pred_fallthru
          _
        %s260 = sand.u32 %s21, 1
        %s261 = scalar_lea.sflag [#allocation6], %s260
        %s262 = sand.u32 %s71, 1
        %s263 = scalar_lea.vmem [#allocation5], %s262
        // Predicated region
        $region41: #{tpu_custom_call.1} parent=35 // pred_check
          %p264 = pneg %p84
        $region42: #{tpu_custom_call.1} parent=35 // pred_check_branch
          %266 = sbr.rel (%p264) target = $region44
        $region43: #{tpu_custom_call.1} parent=35 // pred_region
          %267 = dma.done %s261, 16
        $region44: #{tpu_custom_call.1} parent=35 // pred_fallthru
          _
        %s268 = sand.u32 %s21, 1
        %s269 = scalar_lea.sflag [#allocation6], %s268
        %s270 = sand.u32 %s97, 1
        %s271 = smul.addr %s270, 8
        %s272 = scalar_lea.vmem [#allocation7], %s271
        // Predicated region
        $region45: #{tpu_custom_call.1} parent=35 // pred_check
          %p273 = pneg %p110
        $region46: #{tpu_custom_call.1} parent=35 // pred_check_branch
          %275 = sbr.rel (%p273) target = $region48
        $region47: #{tpu_custom_call.1} parent=35 // pred_region
          %276 = dma.done %s269, 128
        $region48: #{tpu_custom_call.1} parent=35 // pred_fallthru
          _
        %s277 = sand.u32 %s43, 1
        %s278 = scalar_lea.sflag [#allocation4], %s277
        %s279 = sand.u32 %s43, 1
        %s280 = smul.addr %s279, 8
        %s281 = scalar_lea.vmem [#allocation3], %s280
        %p282 = pneg %p56
        %p283 = pneg %p53
        %s284 = sand.u32 %s21, 1
        %s285 = scalar_lea.sflag [#allocation6], %s284
        %s286 = sand.u32 %s71, 1
        %s287 = scalar_lea.vmem [#allocation5], %s286
        %p288 = pneg %p84
        %p289 = pneg %p81
        %s290 = sand.u32 %s21, 1
        %s291 = scalar_lea.sflag [#allocation6], %s290
        %s292 = sand.u32 %s97, 1
        %s293 = smul.addr %s292, 8
        %s294 = scalar_lea.vmem [#allocation7], %s293
        %p295 = pneg %p110
        %p296 = pneg %p107
        %p297 = scmp.lt.s32.totalorder %s25, 1
        %s298 = scalar_select %p297, %s25, 1
        %s299 = scalar_lea.vmem %s3, %s298
        %p300 = pneg %p136
        %p301 = pneg %p133
        %p302 = pneg %p162
        %p303 = pneg %p159
        %p304 = scmp.lt.s32.totalorder %s25, 1
        %s305 = scalar_select %p304, %s25, 1
        %s306 = scalar_lea.vmem %s4, %s305
        %p307 = scmp.lt.s32.totalorder %s25, 1
        %s308 = scalar_select %p307, %s25, 1
        %s309 = scalar_lea.vmem %s3, %s308
        %p310 = scmp.lt.s32.totalorder %s25, 1
        %s311 = scalar_select %p310, %s25, 1
        %s312 = scalar_lea.vmem %s4, %s311
        %p313 = scmp.eq.s32.totalorder %s26, 0
        // Predicated region
        $region49: #{tpu_custom_call.1} parent=35 // pred_check
          %p314 = pneg %p313
        $region50: #{tpu_custom_call.1} parent=35 // pred_check_branch
          %316 = sbr.rel (%p314) target = $region52
        $region51: #{tpu_custom_call.1} parent=35 // pred_region
          %vm317 = vcmask 253952
          %318 = vst.msk [vmem:[#allocation2] sm:$0x1] %vm317, 0.0
        $region52: #{tpu_custom_call.1} parent=35 // pred_fallthru
          _
        %v319 = vld [vmem:[%s255] sm:$0xff]
        %v320 = vld [vmem:[%s263] sm:$0x1]
        %vm321 = vcmask 64512
        %v323 = vsel %vm321, %v320, 0
        %325 = vmatprep.subr.mxu0 0.0
        %v326 = vand.u32 %v319, 4294901760
        %327 = vmatpush1.msra.mxu0 %v326
        %328 = vmatprep.subr.mxu0 0.0
        %329 = vmatpush1.msra.mxu0 0.0
        %330 = vmatprep.subr.mxu0 0.0
        %331 = vmatpush1.msra.mxu0 0.0
        %332 = vmatprep.subr.mxu0 0.0
        %333 = vmatpush1.msra.mxu0 0.0
        %334 = vmatprep.subr.mxu0 0.0
        %335 = vmatpush1.msra.mxu0 0.0
        %336 = vmatprep.subr.mxu0 0.0
        %337 = vmatpush1.msra.mxu0 0.0
        %338 = vmatprep.subr.mxu0 0.0
        %339 = vmatpush1.msra.mxu0 0.0
        %340 = vmatprep.subr.mxu0 0.0
        %341 = vmatpush1.msra.mxu0 0.0
        %342 = vmatprep.subr.mxu0 0.0
        %343 = vmatpush1.msra.mxu0 0.0
        %344 = vmatprep.subr.mxu0 0.0
        %345 = vmatpush1.msra.mxu0 0.0
        %346 = vmatprep.subr.mxu0 0.0
        %347 = vmatpush1.msra.mxu0 0.0
        %348 = vmatprep.subr.mxu0 0.0
        %349 = vmatpush1.msra.mxu0 0.0
        %350 = vmatprep.subr.mxu0 0.0
        %351 = vmatpush1.msra.mxu0 0.0
        %352 = vmatprep.subr.mxu0 0.0
        %353 = vmatpush1.msra.mxu0 0.0
        %354 = vmatprep.subr.mxu0 0.0
        %355 = vmatpush1.msra.mxu0 0.0
        %356 = vmatprep.subr.mxu0 0.0
        %357 = vmatpush1.msra.mxu0 0.0
        %358 = vmatprep.subr.mxu0 0.0
        %359 = vmatpush1.msra.mxu0 0.0
        %360 = vmatprep.subr.mxu0 0.0
        %361 = vmatpush1.msra.mxu0 0.0
        %362 = vmatprep.subr.mxu0 0.0
        %363 = vmatpush1.msra.mxu0 0.0
        %364 = vmatprep.subr.mxu0 0.0
        %365 = vmatpush1.msra.mxu0 0.0
        %366 = vmatprep.subr.mxu0 0.0
        %367 = vmatpush1.msra.mxu0 0.0
        %368 = vmatprep.subr.mxu0 0.0
        %369 = vmatpush1.msra.mxu0 0.0
        %370 = vmatprep.subr.mxu0 0.0
        %371 = vmatpush1.msra.mxu0 0.0
        %372 = vmatprep.subr.mxu0 0.0
        %373 = vmatpush1.msra.mxu0 0.0
        %374 = vmatprep.subr.mxu0 0.0
        %375 = vmatpush1.msra.mxu0 0.0
        %376 = vmatprep.subr.mxu0 0.0
        %377 = vmatpush1.msra.mxu0 0.0
        %378 = vmatprep.subr.mxu0 0.0
        %379 = vmatpush1.msra.mxu0 0.0
        %380 = vmatprep.subr.mxu0 0.0
        %381 = vmatpush1.msra.mxu0 0.0
        %382 = vmatprep.subr.mxu0 0.0
        %383 = vmatpush1.msra.mxu0 0.0
        %384 = vmatprep.subr.mxu0 0.0
        %385 = vmatpush1.msra.mxu0 0.0
        %386 = vmatprep.subr.mxu0 0.0
        %387 = vmatpush1.msra.mxu0 0.0
        %388 = vmatprep.subr.mxu0 0.0
        %389 = vmatpush1.msra.mxu0 0.0
        %390 = vmatprep.mubr.f32.mxu0 0.0
        %v391 = vand.u32 %v323, 4294901760
        %v392 = vsub.f32 %v323, %v391
        %v393 = vand.u32 %v392, 4294901760
        %v394 = vsub.f32 %v392, %v393
        %v395 = vand.u32 %v394, 4294901760
        %396 = vmatmul.mubr.f32.gmra.mrb[0].mxu0 %v395
        %v397 = vpop.f32.mrb[0].mxu0
        %v398 = vadd.f32 0.0, %v397
        %v399 = vpop.f32.mrb[0].mxu0
        %400 = vdwg.mxu0
        %401 = vmatprep.subr.mxu0 0.0
        %v402 = vand.u32 %v319, 4294901760
        %v403 = vsub.f32 %v319, %v402
        %v404 = vand.u32 %v403, 4294901760
        %v405 = vsub.f32 %v403, %v404
        %v406 = vand.u32 %v405, 4294901760
        %407 = vmatpush1.msra.mxu0 %v406
        %408 = vmatprep.subr.mxu0 0.0
        %409 = vmatpush1.msra.mxu0 0.0
        %410 = vmatprep.subr.mxu0 0.0
        %411 = vmatpush1.msra.mxu0 0.0
        %412 = vmatprep.subr.mxu0 0.0
        %413 = vmatpush1.msra.mxu0 0.0
        %414 = vmatprep.subr.mxu0 0.0
        %415 = vmatpush1.msra.mxu0 0.0
        %416 = vmatprep.subr.mxu0 0.0
        %417 = vmatpush1.msra.mxu0 0.0
        %418 = vmatprep.subr.mxu0 0.0
        %419 = vmatpush1.msra.mxu0 0.0
        %420 = vmatprep.subr.mxu0 0.0
        %421 = vmatpush1.msra.mxu0 0.0
        %422 = vmatprep.subr.mxu0 0.0
        %423 = vmatpush1.msra.mxu0 0.0
        %424 = vmatprep.subr.mxu0 0.0
        %425 = vmatpush1.msra.mxu0 0.0
        %426 = vmatprep.subr.mxu0 0.0
        %427 = vmatpush1.msra.mxu0 0.0
        %428 = vmatprep.subr.mxu0 0.0
        %429 = vmatpush1.msra.mxu0 0.0
        %430 = vmatprep.subr.mxu0 0.0
        %431 = vmatpush1.msra.mxu0 0.0
        %432 = vmatprep.subr.mxu0 0.0
        %433 = vmatpush1.msra.mxu0 0.0
        %434 = vmatprep.subr.mxu0 0.0
        %435 = vmatpush1.msra.mxu0 0.0
        %436 = vmatprep.subr.mxu0 0.0
        %437 = vmatpush1.msra.mxu0 0.0
        %438 = vmatprep.subr.mxu0 0.0
        %439 = vmatpush1.msra.mxu0 0.0
        %440 = vmatprep.subr.mxu0 0.0
        %441 = vmatpush1.msra.mxu0 0.0
        %442 = vmatprep.subr.mxu0 0.0
        %443 = vmatpush1.msra.mxu0 0.0
        %444 = vmatprep.subr.mxu0 0.0
        %445 = vmatpush1.msra.mxu0 0.0
        %446 = vmatprep.subr.mxu0 0.0
        %447 = vmatpush1.msra.mxu0 0.0
        %448 = vmatprep.subr.mxu0 0.0
        %449 = vmatpush1.msra.mxu0 0.0
        %450 = vmatprep.subr.mxu0 0.0
        %451 = vmatpush1.msra.mxu0 0.0
        %452 = vmatprep.subr.mxu0 0.0
        %453 = vmatpush1.msra.mxu0 0.0
        %454 = vmatprep.subr.mxu0 0.0
        %455 = vmatpush1.msra.mxu0 0.0
        %456 = vmatprep.subr.mxu0 0.0
        %457 = vmatpush1.msra.mxu0 0.0
        %458 = vmatprep.subr.mxu0 0.0
        %459 = vmatpush1.msra.mxu0 0.0
        %460 = vmatprep.subr.mxu0 0.0
        %461 = vmatpush1.msra.mxu0 0.0
        %462 = vmatprep.subr.mxu0 0.0
        %463 = vmatpush1.msra.mxu0 0.0
        %464 = vmatprep.subr.mxu0 0.0
        %465 = vmatpush1.msra.mxu0 0.0
        %466 = vmatprep.subr.mxu0 0.0
        %467 = vmatpush1.msra.mxu0 0.0
        %468 = vmatprep.subr.mxu0 0.0
        %469 = vmatpush1.msra.mxu0 0.0
        %470 = vmatprep.mubr.f32.mxu0 0.0
        %v471 = vand.u32 %v323, 4294901760
        %472 = vmatmul.mubr.f32.gmra.mrb[0].mxu0 %v471
        %v473 = vpop.f32.mrb[0].mxu0
        %v474 = vadd.f32 %v398, %v473
        %v475 = vpop.f32.mrb[0].mxu0
        %476 = vdwg.mxu0
        %477 = vmatprep.subr.mxu0 0.0
        %v478 = vand.u32 %v319, 4294901760
        %v479 = vsub.f32 %v319, %v478
        %480 = vmatpush1.msra.mxu0 %v479
        %481 = vmatprep.subr.mxu0 0.0
        %482 = vmatpush1.msra.mxu0 0.0
        %483 = vmatprep.subr.mxu0 0.0
        %484 = vmatpush1.msra.mxu0 0.0
        %485 = vmatprep.subr.mxu0 0.0
        %486 = vmatpush1.msra.mxu0 0.0
        %487 = vmatprep.subr.mxu0 0.0
        %488 = vmatpush1.msra.mxu0 0.0
        %489 = vmatprep.subr.mxu0 0.0
        %490 = vmatpush1.msra.mxu0 0.0
        %491 = vmatprep.subr.mxu0 0.0
        %492 = vmatpush1.msra.mxu0 0.0
        %493 = vmatprep.subr.mxu0 0.0
        %494 = vmatpush1.msra.mxu0 0.0
        %495 = vmatprep.subr.mxu0 0.0
        %496 = vmatpush1.msra.mxu0 0.0
        %497 = vmatprep.subr.mxu0 0.0
        %498 = vmatpush1.msra.mxu0 0.0
        %499 = vmatprep.subr.mxu0 0.0
        %500 = vmatpush1.msra.mxu0 0.0
        %501 = vmatprep.subr.mxu0 0.0
        %502 = vmatpush1.msra.mxu0 0.0
        %503 = vmatprep.subr.mxu0 0.0
        %504 = vmatpush1.msra.mxu0 0.0
        %505 = vmatprep.subr.mxu0 0.0
        %506 = vmatpush1.msra.mxu0 0.0
        %507 = vmatprep.subr.mxu0 0.0
        %508 = vmatpush1.msra.mxu0 0.0
        %509 = vmatprep.subr.mxu0 0.0
        %510 = vmatpush1.msra.mxu0 0.0
        %511 = vmatprep.subr.mxu0 0.0
        %512 = vmatpush1.msra.mxu0 0.0
        %513 = vmatprep.subr.mxu0 0.0
        %514 = vmatpush1.msra.mxu0 0.0
        %515 = vmatprep.subr.mxu0 0.0
        %516 = vmatpush1.msra.mxu0 0.0
        %517 = vmatprep.subr.mxu0 0.0
        %518 = vmatpush1.msra.mxu0 0.0
        %519 = vmatprep.subr.mxu0 0.0
        %520 = vmatpush1.msra.mxu0 0.0
        %521 = vmatprep.subr.mxu0 0.0
        %522 = vmatpush1.msra.mxu0 0.0
        %523 = vmatprep.subr.mxu0 0.0
        %524 = vmatpush1.msra.mxu0 0.0
        %525 = vmatprep.subr.mxu0 0.0
        %526 = vmatpush1.msra.mxu0 0.0
        %527 = vmatprep.subr.mxu0 0.0
        %528 = vmatpush1.msra.mxu0 0.0
        %529 = vmatprep.subr.mxu0 0.0
        %530 = vmatpush1.msra.mxu0 0.0
        %531 = vmatprep.subr.mxu0 0.0
        %532 = vmatpush1.msra.mxu0 0.0
        %533 = vmatprep.subr.mxu0 0.0
        %534 = vmatpush1.msra.mxu0 0.0
        %535 = vmatprep.subr.mxu0 0.0
        %536 = vmatpush1.msra.mxu0 0.0
        %537 = vmatprep.subr.mxu0 0.0
        %538 = vmatpush1.msra.mxu0 0.0
        %539 = vmatprep.subr.mxu0 0.0
        %540 = vmatpush1.msra.mxu0 0.0
        %541 = vmatprep.subr.mxu0 0.0
        %542 = vmatpush1.msra.mxu0 0.0
        %543 = vmatprep.mubr.f32.mxu0 0.0
        %v544 = vand.u32 %v323, 4294901760
        %v545 = vsub.f32 %v323, %v544
        %546 = vmatmul.mubr.f32.gmra.mrb[0].mxu0 %v545
        %v547 = vpop.f32.mrb[0].mxu0
        %v548 = vadd.f32 %v474, %v547
        %v549 = vpop.f32.mrb[0].mxu0
        %550 = vdwg.mxu0
        %551 = vmatprep.subr.mxu0 0.0
        %v552 = vand.u32 %v319, 4294901760
        %553 = vmatpush1.msra.mxu0 %v552
        %554 = vmatprep.subr.mxu0 0.0
        %555 = vmatpush1.msra.mxu0 0.0
        %556 = vmatprep.subr.mxu0 0.0
        %557 = vmatpush1.msra.mxu0 0.0
        %558 = vmatprep.subr.mxu0 0.0
        %559 = vmatpush1.msra.mxu0 0.0
        %560 = vmatprep.subr.mxu0 0.0
        %561 = vmatpush1.msra.mxu0 0.0
        %562 = vmatprep.subr.mxu0 0.0
        %563 = vmatpush1.msra.mxu0 0.0
        %564 = vmatprep.subr.mxu0 0.0
        %565 = vmatpush1.msra.mxu0 0.0
        %566 = vmatprep.subr.mxu0 0.0
        %567 = vmatpush1.msra.mxu0 0.0
        %568 = vmatprep.subr.mxu0 0.0
        %569 = vmatpush1.msra.mxu0 0.0
        %570 = vmatprep.subr.mxu0 0.0
        %571 = vmatpush1.msra.mxu0 0.0
        %572 = vmatprep.subr.mxu0 0.0
        %573 = vmatpush1.msra.mxu0 0.0
        %574 = vmatprep.subr.mxu0 0.0
        %575 = vmatpush1.msra.mxu0 0.0
        %576 = vmatprep.subr.mxu0 0.0
        %577 = vmatpush1.msra.mxu0 0.0
        %578 = vmatprep.subr.mxu0 0.0
        %579 = vmatpush1.msra.mxu0 0.0
        %580 = vmatprep.subr.mxu0 0.0
        %581 = vmatpush1.msra.mxu0 0.0
        %582 = vmatprep.subr.mxu0 0.0
        %583 = vmatpush1.msra.mxu0 0.0
        %584 = vmatprep.subr.mxu0 0.0
        %585 = vmatpush1.msra.mxu0 0.0
        %586 = vmatprep.subr.mxu0 0.0
        %587 = vmatpush1.msra.mxu0 0.0
        %588 = vmatprep.subr.mxu0 0.0
        %589 = vmatpush1.msra.mxu0 0.0
        %590 = vmatprep.subr.mxu0 0.0
        %591 = vmatpush1.msra.mxu0 0.0
        %592 = vmatprep.subr.mxu0 0.0
        %593 = vmatpush1.msra.mxu0 0.0
        %594 = vmatprep.subr.mxu0 0.0
        %595 = vmatpush1.msra.mxu0 0.0
        %596 = vmatprep.subr.mxu0 0.0
        %597 = vmatpush1.msra.mxu0 0.0
        %598 = vmatprep.subr.mxu0 0.0
        %599 = vmatpush1.msra.mxu0 0.0
        %600 = vmatprep.subr.mxu0 0.0
        %601 = vmatpush1.msra.mxu0 0.0
        %602 = vmatprep.subr.mxu0 0.0
        %603 = vmatpush1.msra.mxu0 0.0
        %604 = vmatprep.subr.mxu0 0.0
        %605 = vmatpush1.msra.mxu0 0.0
        %606 = vmatprep.subr.mxu0 0.0
        %607 = vmatpush1.msra.mxu0 0.0
        %608 = vmatprep.subr.mxu0 0.0
        %609 = vmatpush1.msra.mxu0 0.0
        %610 = vmatprep.subr.mxu0 0.0
        %611 = vmatpush1.msra.mxu0 0.0
        %612 = vmatprep.subr.mxu0 0.0
        %613 = vmatpush1.msra.mxu0 0.0
        %614 = vmatprep.subr.mxu0 0.0
        %615 = vmatpush1.msra.mxu0 0.0
        %616 = vmatprep.mubr.f32.mxu0 0.0
        %v617 = vand.u32 %v323, 4294901760
        %v618 = vsub.f32 %v323, %v617
        %v619 = vand.u32 %v618, 4294901760
        %620 = vmatmul.mubr.f32.gmra.mrb[0].mxu0 %v619
        %v621 = vpop.f32.mrb[0].mxu0
        %v622 = vadd.f32 %v548, %v621
        %v623 = vpop.f32.mrb[0].mxu0
        %624 = vdwg.mxu0
        %625 = vmatprep.subr.mxu0 0.0
        %v626 = vand.u32 %v319, 4294901760
        %v627 = vsub.f32 %v319, %v626
        %v628 = vand.u32 %v627, 4294901760
        %629 = vmatpush1.msra.mxu0 %v628
        %630 = vmatprep.subr.mxu0 0.0
        %631 = vmatpush1.msra.mxu0 0.0
        %632 = vmatprep.subr.mxu0 0.0
        %633 = vmatpush1.msra.mxu0 0.0
        %634 = vmatprep.subr.mxu0 0.0
        %635 = vmatpush1.msra.mxu0 0.0
        %636 = vmatprep.subr.mxu0 0.0
        %637 = vmatpush1.msra.mxu0 0.0
        %638 = vmatprep.subr.mxu0 0.0
        %639 = vmatpush1.msra.mxu0 0.0
        %640 = vmatprep.subr.mxu0 0.0
        %641 = vmatpush1.msra.mxu0 0.0
        %642 = vmatprep.subr.mxu0 0.0
        %643 = vmatpush1.msra.mxu0 0.0
        %644 = vmatprep.subr.mxu0 0.0
        %645 = vmatpush1.msra.mxu0 0.0
        %646 = vmatprep.subr.mxu0 0.0
        %647 = vmatpush1.msra.mxu0 0.0
        %648 = vmatprep.subr.mxu0 0.0
        %649 = vmatpush1.msra.mxu0 0.0
        %650 = vmatprep.subr.mxu0 0.0
        %651 = vmatpush1.msra.mxu0 0.0
        %652 = vmatprep.subr.mxu0 0.0
        %653 = vmatpush1.msra.mxu0 0.0
        %654 = vmatprep.subr.mxu0 0.0
        %655 = vmatpush1.msra.mxu0 0.0
        %656 = vmatprep.subr.mxu0 0.0
        %657 = vmatpush1.msra.mxu0 0.0
        %658 = vmatprep.subr.mxu0 0.0
        %659 = vmatpush1.msra.mxu0 0.0
        %660 = vmatprep.subr.mxu0 0.0
        %661 = vmatpush1.msra.mxu0 0.0
        %662 = vmatprep.subr.mxu0 0.0
        %663 = vmatpush1.msra.mxu0 0.0
        %664 = vmatprep.subr.mxu0 0.0
        %665 = vmatpush1.msra.mxu0 0.0
        %666 = vmatprep.subr.mxu0 0.0
        %667 = vmatpush1.msra.mxu0 0.0
        %668 = vmatprep.subr.mxu0 0.0
        %669 = vmatpush1.msra.mxu0 0.0
        %670 = vmatprep.subr.mxu0 0.0
        %671 = vmatpush1.msra.mxu0 0.0
        %672 = vmatprep.subr.mxu0 0.0
        %673 = vmatpush1.msra.mxu0 0.0
        %674 = vmatprep.subr.mxu0 0.0
        %675 = vmatpush1.msra.mxu0 0.0
        %676 = vmatprep.subr.mxu0 0.0
        %677 = vmatpush1.msra.mxu0 0.0
        %678 = vmatprep.subr.mxu0 0.0
        %679 = vmatpush1.msra.mxu0 0.0
        %680 = vmatprep.subr.mxu0 0.0
        %681 = vmatpush1.msra.mxu0 0.0
        %682 = vmatprep.subr.mxu0 0.0
        %683 = vmatpush1.msra.mxu0 0.0
        %684 = vmatprep.subr.mxu0 0.0
        %685 = vmatpush1.msra.mxu0 0.0
        %686 = vmatprep.subr.mxu0 0.0
        %687 = vmatpush1.msra.mxu0 0.0
        %688 = vmatprep.subr.mxu0 0.0
        %689 = vmatpush1.msra.mxu0 0.0
        %690 = vmatprep.subr.mxu0 0.0
        %691 = vmatpush1.msra.mxu0 0.0
        %692 = vmatprep.mubr.f32.mxu0 0.0
        %v693 = vand.u32 %v323, 4294901760
        %694 = vmatmul.mubr.f32.gmra.mrb[0].mxu0 %v693
        %v695 = vpop.f32.mrb[0].mxu0
        %v696 = vadd.f32 %v622, %v695
        %v697 = vpop.f32.mrb[0].mxu0
        %698 = vdwg.mxu0
        %699 = vmatprep.subr.mxu0 0.0
        %v700 = vand.u32 %v319, 4294901760
        %701 = vmatpush1.msra.mxu0 %v700
        %702 = vmatprep.subr.mxu0 0.0
        %703 = vmatpush1.msra.mxu0 0.0
        %704 = vmatprep.subr.mxu0 0.0
        %705 = vmatpush1.msra.mxu0 0.0
        %706 = vmatprep.subr.mxu0 0.0
        %707 = vmatpush1.msra.mxu0 0.0
        %708 = vmatprep.subr.mxu0 0.0
        %709 = vmatpush1.msra.mxu0 0.0
        %710 = vmatprep.subr.mxu0 0.0
        %711 = vmatpush1.msra.mxu0 0.0
        %712 = vmatprep.subr.mxu0 0.0
        %713 = vmatpush1.msra.mxu0 0.0
        %714 = vmatprep.subr.mxu0 0.0
        %715 = vmatpush1.msra.mxu0 0.0
        %716 = vmatprep.subr.mxu0 0.0
        %717 = vmatpush1.msra.mxu0 0.0
        %718 = vmatprep.subr.mxu0 0.0
        %719 = vmatpush1.msra.mxu0 0.0
        %720 = vmatprep.subr.mxu0 0.0
        %721 = vmatpush1.msra.mxu0 0.0
        %722 = vmatprep.subr.mxu0 0.0
        %723 = vmatpush1.msra.mxu0 0.0
        %724 = vmatprep.subr.mxu0 0.0
        %725 = vmatpush1.msra.mxu0 0.0
        %726 = vmatprep.subr.mxu0 0.0
        %727 = vmatpush1.msra.mxu0 0.0
        %728 = vmatprep.subr.mxu0 0.0
        %729 = vmatpush1.msra.mxu0 0.0
        %730 = vmatprep.subr.mxu0 0.0
        %731 = vmatpush1.msra.mxu0 0.0
        %732 = vmatprep.subr.mxu0 0.0
        %733 = vmatpush1.msra.mxu0 0.0
        %734 = vmatprep.subr.mxu0 0.0
        %735 = vmatpush1.msra.mxu0 0.0
        %736 = vmatprep.subr.mxu0 0.0
        %737 = vmatpush1.msra.mxu0 0.0
        %738 = vmatprep.subr.mxu0 0.0
        %739 = vmatpush1.msra.mxu0 0.0
        %740 = vmatprep.subr.mxu0 0.0
        %741 = vmatpush1.msra.mxu0 0.0
        %742 = vmatprep.subr.mxu0 0.0
        %743 = vmatpush1.msra.mxu0 0.0
        %744 = vmatprep.subr.mxu0 0.0
        %745 = vmatpush1.msra.mxu0 0.0
        %746 = vmatprep.subr.mxu0 0.0
        %747 = vmatpush1.msra.mxu0 0.0
        %748 = vmatprep.subr.mxu0 0.0
        %749 = vmatpush1.msra.mxu0 0.0
        %750 = vmatprep.subr.mxu0 0.0
        %751 = vmatpush1.msra.mxu0 0.0
        %752 = vmatprep.subr.mxu0 0.0
        %753 = vmatpush1.msra.mxu0 0.0
        %754 = vmatprep.subr.mxu0 0.0
        %755 = vmatpush1.msra.mxu0 0.0
        %756 = vmatprep.subr.mxu0 0.0
        %757 = vmatpush1.msra.mxu0 0.0
        %758 = vmatprep.subr.mxu0 0.0
        %759 = vmatpush1.msra.mxu0 0.0
        %760 = vmatprep.subr.mxu0 0.0
        %761 = vmatpush1.msra.mxu0 0.0
        %762 = vmatprep.subr.mxu0 0.0
        %763 = vmatpush1.msra.mxu0 0.0
        %764 = vmatprep.mubr.f32.mxu0 0.0
        %v765 = vand.u32 %v323, 4294901760
        %766 = vmatmul.mubr.f32.gmra.mrb[0].mxu0 %v765
        %v767 = vpop.f32.mrb[0].mxu0
        %v768 = vadd.f32 %v696, %v767
        %v769 = vpop.f32.mrb[0].mxu0
        %770 = vdwg.mxu0
        %vm771 = vcmask 57344
        %v772 = vsel %vm771, %v320, 0.0
        %773 = vadd.xlane.f32.xlu0 %v772
        %v774 = vpop.xlane.xlu0 %773
        %v775 = vmax.f32 %v774, 1e-09
        %v776 = vld [vmem:[#allocation2] sm:$0x1]
        %v777 = vrcp.pop %v775
        %v778 = vmul.f32 %v768, %v777
        %v779 = vadd.f32 %v776, %v778
        %vm780 = vcmask 253952
        %781 = vst.msk [vmem:[#allocation2] sm:$0x1] %vm780, %v779
        %p782 = scmp.eq.s32.totalorder %s26, 2
        // Predicated region
        $region53: #{tpu_custom_call.1} parent=35 // pred_check
          %p783 = pneg %p782
        $region54: #{tpu_custom_call.1} parent=35 // pred_check_branch
          %785 = sbr.rel (%p783) target = $region56
        $region55: #{tpu_custom_call.1} parent=35 // pred_region
          %v786 = vld [vmem:[#allocation2] sm:$0x1]
          %v787 = vmul.f32 %v786, 0.33333334
          %v788 = vld [vmem:[%s272] sm:$0xff]
          %v790 = vsel %vm321, 1.0, 0
          %792 = vmatprep.subr.mxu0 0.0
          %v793 = vand.u32 %v788, 4294901760
          %794 = vmatpush1.msra.mxu0 %v793
          %795 = vmatprep.subr.mxu0 0.0
          %796 = vmatpush1.msra.mxu0 0.0
          %797 = vmatprep.subr.mxu0 0.0
          %798 = vmatpush1.msra.mxu0 0.0
          %799 = vmatprep.subr.mxu0 0.0
          %800 = vmatpush1.msra.mxu0 0.0
          %801 = vmatprep.subr.mxu0 0.0
          %802 = vmatpush1.msra.mxu0 0.0
          %803 = vmatprep.subr.mxu0 0.0
          %804 = vmatpush1.msra.mxu0 0.0
          %805 = vmatprep.subr.mxu0 0.0
          %806 = vmatpush1.msra.mxu0 0.0
          %807 = vmatprep.subr.mxu0 0.0
          %808 = vmatpush1.msra.mxu0 0.0
          %809 = vmatprep.subr.mxu0 0.0
          %810 = vmatpush1.msra.mxu0 0.0
          %811 = vmatprep.subr.mxu0 0.0
          %812 = vmatpush1.msra.mxu0 0.0
          %813 = vmatprep.subr.mxu0 0.0
          %814 = vmatpush1.msra.mxu0 0.0
          %815 = vmatprep.subr.mxu0 0.0
          %816 = vmatpush1.msra.mxu0 0.0
          %817 = vmatprep.subr.mxu0 0.0
          %818 = vmatpush1.msra.mxu0 0.0
          %819 = vmatprep.subr.mxu0 0.0
          %820 = vmatpush1.msra.mxu0 0.0
          %821 = vmatprep.subr.mxu0 0.0
          %822 = vmatpush1.msra.mxu0 0.0
          %823 = vmatprep.subr.mxu0 0.0
          %824 = vmatpush1.msra.mxu0 0.0
          %825 = vmatprep.subr.mxu0 0.0
          %826 = vmatpush1.msra.mxu0 0.0
          %827 = vmatprep.subr.mxu0 0.0
          %828 = vmatpush1.msra.mxu0 0.0
          %829 = vmatprep.subr.mxu0 0.0
          %830 = vmatpush1.msra.mxu0 0.0
          %831 = vmatprep.subr.mxu0 0.0
          %832 = vmatpush1.msra.mxu0 0.0
          %833 = vmatprep.subr.mxu0 0.0
          %834 = vmatpush1.msra.mxu0 0.0
          %835 = vmatprep.subr.mxu0 0.0
          %836 = vmatpush1.msra.mxu0 0.0
          %837 = vmatprep.subr.mxu0 0.0
          %838 = vmatpush1.msra.mxu0 0.0
          %839 = vmatprep.subr.mxu0 0.0
          %840 = vmatpush1.msra.mxu0 0.0
          %841 = vmatprep.subr.mxu0 0.0
          %842 = vmatpush1.msra.mxu0 0.0
          %843 = vmatprep.subr.mxu0 0.0
          %844 = vmatpush1.msra.mxu0 0.0
          %845 = vmatprep.subr.mxu0 0.0
          %846 = vmatpush1.msra.mxu0 0.0
          %847 = vmatprep.subr.mxu0 0.0
          %848 = vmatpush1.msra.mxu0 0.0
          %849 = vmatprep.subr.mxu0 0.0
          %850 = vmatpush1.msra.mxu0 0.0
          %851 = vmatprep.subr.mxu0 0.0
          %852 = vmatpush1.msra.mxu0 0.0
          %853 = vmatprep.subr.mxu0 0.0
          %854 = vmatpush1.msra.mxu0 0.0
          %855 = vmatprep.subr.mxu0 0.0
          %856 = vmatpush1.msra.mxu0 0.0
          %857 = vmatprep.mubr.f32.mxu0 0.0
          %v858 = vand.u32 %v790, 4294901760
          %v859 = vsub.f32 %v790, %v858
          %v860 = vand.u32 %v859, 4294901760
          %v861 = vsub.f32 %v859, %v860
          %v862 = vand.u32 %v861, 4294901760
          %863 = vmatmul.mubr.f32.gmra.mrb[0].mxu0 %v862
          %v864 = vpop.f32.mrb[0].mxu0
          %v865 = vadd.f32 0.0, %v864
          %v866 = vpop.f32.mrb[0].mxu0
          %867 = vdwg.mxu0
          %868 = vmatprep.subr.mxu0 0.0
          %v869 = vand.u32 %v788, 4294901760
          %v870 = vsub.f32 %v788, %v869
          %v871 = vand.u32 %v870, 4294901760
          %v872 = vsub.f32 %v870, %v871
          %v873 = vand.u32 %v872, 4294901760
          %874 = vmatpush1.msra.mxu0 %v873
          %875 = vmatprep.subr.mxu0 0.0
          %876 = vmatpush1.msra.mxu0 0.0
          %877 = vmatprep.subr.mxu0 0.0
          %878 = vmatpush1.msra.mxu0 0.0
          %879 = vmatprep.subr.mxu0 0.0
          %880 = vmatpush1.msra.mxu0 0.0
          %881 = vmatprep.subr.mxu0 0.0
          %882 = vmatpush1.msra.mxu0 0.0
          %883 = vmatprep.subr.mxu0 0.0
          %884 = vmatpush1.msra.mxu0 0.0
          %885 = vmatprep.subr.mxu0 0.0
          %886 = vmatpush1.msra.mxu0 0.0
          %887 = vmatprep.subr.mxu0 0.0
          %888 = vmatpush1.msra.mxu0 0.0
          %889 = vmatprep.subr.mxu0 0.0
          %890 = vmatpush1.msra.mxu0 0.0
          %891 = vmatprep.subr.mxu0 0.0
          %892 = vmatpush1.msra.mxu0 0.0
          %893 = vmatprep.subr.mxu0 0.0
          %894 = vmatpush1.msra.mxu0 0.0
          %895 = vmatprep.subr.mxu0 0.0
          %896 = vmatpush1.msra.mxu0 0.0
          %897 = vmatprep.subr.mxu0 0.0
          %898 = vmatpush1.msra.mxu0 0.0
          %899 = vmatprep.subr.mxu0 0.0
          %900 = vmatpush1.msra.mxu0 0.0
          %901 = vmatprep.subr.mxu0 0.0
          %902 = vmatpush1.msra.mxu0 0.0
          %903 = vmatprep.subr.mxu0 0.0
          %904 = vmatpush1.msra.mxu0 0.0
          %905 = vmatprep.subr.mxu0 0.0
          %906 = vmatpush1.msra.mxu0 0.0
          %907 = vmatprep.subr.mxu0 0.0
          %908 = vmatpush1.msra.mxu0 0.0
          %909 = vmatprep.subr.mxu0 0.0
          %910 = vmatpush1.msra.mxu0 0.0
          %911 = vmatprep.subr.mxu0 0.0
          %912 = vmatpush1.msra.mxu0 0.0
          %913 = vmatprep.subr.mxu0 0.0
          %914 = vmatpush1.msra.mxu0 0.0
          %915 = vmatprep.subr.mxu0 0.0
          %916 = vmatpush1.msra.mxu0 0.0
          %917 = vmatprep.subr.mxu0 0.0
          %918 = vmatpush1.msra.mxu0 0.0
          %919 = vmatprep.subr.mxu0 0.0
          %920 = vmatpush1.msra.mxu0 0.0
          %921 = vmatprep.subr.mxu0 0.0
          %922 = vmatpush1.msra.mxu0 0.0
          %923 = vmatprep.subr.mxu0 0.0
          %924 = vmatpush1.msra.mxu0 0.0
          %925 = vmatprep.subr.mxu0 0.0
          %926 = vmatpush1.msra.mxu0 0.0
          %927 = vmatprep.subr.mxu0 0.0
          %928 = vmatpush1.msra.mxu0 0.0
          %929 = vmatprep.subr.mxu0 0.0
          %930 = vmatpush1.msra.mxu0 0.0
          %931 = vmatprep.subr.mxu0 0.0
          %932 = vmatpush1.msra.mxu0 0.0
          %933 = vmatprep.subr.mxu0 0.0
          %934 = vmatpush1.msra.mxu0 0.0
          %935 = vmatprep.subr.mxu0 0.0
          %936 = vmatpush1.msra.mxu0 0.0
          %937 = vmatprep.mubr.f32.mxu0 0.0
          %v938 = vand.u32 %v790, 4294901760
          %939 = vmatmul.mubr.f32.gmra.mrb[0].mxu0 %v938
          %v940 = vpop.f32.mrb[0].mxu0
          %v941 = vadd.f32 %v865, %v940
          %v942 = vpop.f32.mrb[0].mxu0
          %943 = vdwg.mxu0
          %944 = vmatprep.subr.mxu0 0.0
          %v945 = vand.u32 %v788, 4294901760
          %v946 = vsub.f32 %v788, %v945
          %947 = vmatpush1.msra.mxu0 %v946
          %948 = vmatprep.subr.mxu0 0.0
          %949 = vmatpush1.msra.mxu0 0.0
          %950 = vmatprep.subr.mxu0 0.0
          %951 = vmatpush1.msra.mxu0 0.0
          %952 = vmatprep.subr.mxu0 0.0
          %953 = vmatpush1.msra.mxu0 0.0
          %954 = vmatprep.subr.mxu0 0.0
          %955 = vmatpush1.msra.mxu0 0.0
          %956 = vmatprep.subr.mxu0 0.0
          %957 = vmatpush1.msra.mxu0 0.0
          %958 = vmatprep.subr.mxu0 0.0
          %959 = vmatpush1.msra.mxu0 0.0
          %960 = vmatprep.subr.mxu0 0.0
          %961 = vmatpush1.msra.mxu0 0.0
          %962 = vmatprep.subr.mxu0 0.0
          %963 = vmatpush1.msra.mxu0 0.0
          %964 = vmatprep.subr.mxu0 0.0
          %965 = vmatpush1.msra.mxu0 0.0
          %966 = vmatprep.subr.mxu0 0.0
          %967 = vmatpush1.msra.mxu0 0.0
          %968 = vmatprep.subr.mxu0 0.0
          %969 = vmatpush1.msra.mxu0 0.0
          %970 = vmatprep.subr.mxu0 0.0
          %971 = vmatpush1.msra.mxu0 0.0
          %972 = vmatprep.subr.mxu0 0.0
          %973 = vmatpush1.msra.mxu0 0.0
          %974 = vmatprep.subr.mxu0 0.0
          %975 = vmatpush1.msra.mxu0 0.0
          %976 = vmatprep.subr.mxu0 0.0
          %977 = vmatpush1.msra.mxu0 0.0
          %978 = vmatprep.subr.mxu0 0.0
          %979 = vmatpush1.msra.mxu0 0.0
          %980 = vmatprep.subr.mxu0 0.0
          %981 = vmatpush1.msra.mxu0 0.0
          %982 = vmatprep.subr.mxu0 0.0
          %983 = vmatpush1.msra.mxu0 0.0
          %984 = vmatprep.subr.mxu0 0.0
          %985 = vmatpush1.msra.mxu0 0.0
          %986 = vmatprep.subr.mxu0 0.0
          %987 = vmatpush1.msra.mxu0 0.0
          %988 = vmatprep.subr.mxu0 0.0
          %989 = vmatpush1.msra.mxu0 0.0
          %990 = vmatprep.subr.mxu0 0.0
          %991 = vmatpush1.msra.mxu0 0.0
          %992 = vmatprep.subr.mxu0 0.0
          %993 = vmatpush1.msra.mxu0 0.0
          %994 = vmatprep.subr.mxu0 0.0
          %995 = vmatpush1.msra.mxu0 0.0
          %996 = vmatprep.subr.mxu0 0.0
          %997 = vmatpush1.msra.mxu0 0.0
          %998 = vmatprep.subr.mxu0 0.0
          %999 = vmatpush1.msra.mxu0 0.0
          %1000 = vmatprep.subr.mxu0 0.0
          %1001 = vmatpush1.msra.mxu0 0.0
          %1002 = vmatprep.subr.mxu0 0.0
          %1003 = vmatpush1.msra.mxu0 0.0
          %1004 = vmatprep.subr.mxu0 0.0
          %1005 = vmatpush1.msra.mxu0 0.0
          %1006 = vmatprep.subr.mxu0 0.0
          %1007 = vmatpush1.msra.mxu0 0.0
          %1008 = vmatprep.subr.mxu0 0.0
          %1009 = vmatpush1.msra.mxu0 0.0
          %1010 = vmatprep.mubr.f32.mxu0 0.0
          %v1011 = vand.u32 %v790, 4294901760
          %v1012 = vsub.f32 %v790, %v1011
          %1013 = vmatmul.mubr.f32.gmra.mrb[0].mxu0 %v1012
          %v1014 = vpop.f32.mrb[0].mxu0
          %v1015 = vadd.f32 %v941, %v1014
          %v1016 = vpop.f32.mrb[0].mxu0
          %1017 = vdwg.mxu0
          %1018 = vmatprep.subr.mxu0 0.0
          %v1019 = vand.u32 %v788, 4294901760
          %1020 = vmatpush1.msra.mxu0 %v1019
          %1021 = vmatprep.subr.mxu0 0.0
          %1022 = vmatpush1.msra.mxu0 0.0
          %1023 = vmatprep.subr.mxu0 0.0
          %1024 = vmatpush1.msra.mxu0 0.0
          %1025 = vmatprep.subr.mxu0 0.0
          %1026 = vmatpush1.msra.mxu0 0.0
          %1027 = vmatprep.subr.mxu0 0.0
          %1028 = vmatpush1.msra.mxu0 0.0
          %1029 = vmatprep.subr.mxu0 0.0
          %1030 = vmatpush1.msra.mxu0 0.0
          %1031 = vmatprep.subr.mxu0 0.0
          %1032 = vmatpush1.msra.mxu0 0.0
          %1033 = vmatprep.subr.mxu0 0.0
          %1034 = vmatpush1.msra.mxu0 0.0
          %1035 = vmatprep.subr.mxu0 0.0
          %1036 = vmatpush1.msra.mxu0 0.0
          %1037 = vmatprep.subr.mxu0 0.0
          %1038 = vmatpush1.msra.mxu0 0.0
          %1039 = vmatprep.subr.mxu0 0.0
          %1040 = vmatpush1.msra.mxu0 0.0
          %1041 = vmatprep.subr.mxu0 0.0
          %1042 = vmatpush1.msra.mxu0 0.0
          %1043 = vmatprep.subr.mxu0 0.0
          %1044 = vmatpush1.msra.mxu0 0.0
          %1045 = vmatprep.subr.mxu0 0.0
          %1046 = vmatpush1.msra.mxu0 0.0
          %1047 = vmatprep.subr.mxu0 0.0
          %1048 = vmatpush1.msra.mxu0 0.0
          %1049 = vmatprep.subr.mxu0 0.0
          %1050 = vmatpush1.msra.mxu0 0.0
          %1051 = vmatprep.subr.mxu0 0.0
          %1052 = vmatpush1.msra.mxu0 0.0
          %1053 = vmatprep.subr.mxu0 0.0
          %1054 = vmatpush1.msra.mxu0 0.0
          %1055 = vmatprep.subr.mxu0 0.0
          %1056 = vmatpush1.msra.mxu0 0.0
          %1057 = vmatprep.subr.mxu0 0.0
          %1058 = vmatpush1.msra.mxu0 0.0
          %1059 = vmatprep.subr.mxu0 0.0
          %1060 = vmatpush1.msra.mxu0 0.0
          %1061 = vmatprep.subr.mxu0 0.0
          %1062 = vmatpush1.msra.mxu0 0.0
          %1063 = vmatprep.subr.mxu0 0.0
          %1064 = vmatpush1.msra.mxu0 0.0
          %1065 = vmatprep.subr.mxu0 0.0
          %1066 = vmatpush1.msra.mxu0 0.0
          %1067 = vmatprep.subr.mxu0 0.0
          %1068 = vmatpush1.msra.mxu0 0.0
          %1069 = vmatprep.subr.mxu0 0.0
          %1070 = vmatpush1.msra.mxu0 0.0
          %1071 = vmatprep.subr.mxu0 0.0
          %1072 = vmatpush1.msra.mxu0 0.0
          %1073 = vmatprep.subr.mxu0 0.0
          %1074 = vmatpush1.msra.mxu0 0.0
          %1075 = vmatprep.subr.mxu0 0.0
          %1076 = vmatpush1.msra.mxu0 0.0
          %1077 = vmatprep.subr.mxu0 0.0
          %1078 = vmatpush1.msra.mxu0 0.0
          %1079 = vmatprep.subr.mxu0 0.0
          %1080 = vmatpush1.msra.mxu0 0.0
          %1081 = vmatprep.subr.mxu0 0.0
          %1082 = vmatpush1.msra.mxu0 0.0
          %1083 = vmatprep.mubr.f32.mxu0 0.0
          %v1084 = vand.u32 %v790, 4294901760
          %v1085 = vsub.f32 %v790, %v1084
          %v1086 = vand.u32 %v1085, 4294901760
          %1087 = vmatmul.mubr.f32.gmra.mrb[0].mxu0 %v1086
          %v1088 = vpop.f32.mrb[0].mxu0
          %v1089 = vadd.f32 %v1015, %v1088
          %v1090 = vpop.f32.mrb[0].mxu0
          %1091 = vdwg.mxu0
          %1092 = vmatprep.subr.mxu0 0.0
          %v1093 = vand.u32 %v788, 4294901760
          %v1094 = vsub.f32 %v788, %v1093
          %v1095 = vand.u32 %v1094, 4294901760
          %1096 = vmatpush1.msra.mxu0 %v1095
          %1097 = vmatprep.subr.mxu0 0.0
          %1098 = vmatpush1.msra.mxu0 0.0
          %1099 = vmatprep.subr.mxu0 0.0
          %1100 = vmatpush1.msra.mxu0 0.0
          %1101 = vmatprep.subr.mxu0 0.0
          %1102 = vmatpush1.msra.mxu0 0.0
          %1103 = vmatprep.subr.mxu0 0.0
          %1104 = vmatpush1.msra.mxu0 0.0
          %1105 = vmatprep.subr.mxu0 0.0
          %1106 = vmatpush1.msra.mxu0 0.0
          %1107 = vmatprep.subr.mxu0 0.0
          %1108 = vmatpush1.msra.mxu0 0.0
          %1109 = vmatprep.subr.mxu0 0.0
          %1110 = vmatpush1.msra.mxu0 0.0
          %1111 = vmatprep.subr.mxu0 0.0
          %1112 = vmatpush1.msra.mxu0 0.0
          %1113 = vmatprep.subr.mxu0 0.0
          %1114 = vmatpush1.msra.mxu0 0.0
          %1115 = vmatprep.subr.mxu0 0.0
          %1116 = vmatpush1.msra.mxu0 0.0
          %1117 = vmatprep.subr.mxu0 0.0
          %1118 = vmatpush1.msra.mxu0 0.0
          %1119 = vmatprep.subr.mxu0 0.0
          %1120 = vmatpush1.msra.mxu0 0.0
          %1121 = vmatprep.subr.mxu0 0.0
          %1122 = vmatpush1.msra.mxu0 0.0
          %1123 = vmatprep.subr.mxu0 0.0
          %1124 = vmatpush1.msra.mxu0 0.0
          %1125 = vmatprep.subr.mxu0 0.0
          %1126 = vmatpush1.msra.mxu0 0.0
          %1127 = vmatprep.subr.mxu0 0.0
          %1128 = vmatpush1.msra.mxu0 0.0
          %1129 = vmatprep.subr.mxu0 0.0
          %1130 = vmatpush1.msra.mxu0 0.0
          %1131 = vmatprep.subr.mxu0 0.0
          %1132 = vmatpush1.msra.mxu0 0.0
          %1133 = vmatprep.subr.mxu0 0.0
          %1134 = vmatpush1.msra.mxu0 0.0
          %1135 = vmatprep.subr.mxu0 0.0
          %1136 = vmatpush1.msra.mxu0 0.0
          %1137 = vmatprep.subr.mxu0 0.0
          %1138 = vmatpush1.msra.mxu0 0.0
          %1139 = vmatprep.subr.mxu0 0.0
          %1140 = vmatpush1.msra.mxu0 0.0
          %1141 = vmatprep.subr.mxu0 0.0
          %1142 = vmatpush1.msra.mxu0 0.0
          %1143 = vmatprep.subr.mxu0 0.0
          %1144 = vmatpush1.msra.mxu0 0.0
          %1145 = vmatprep.subr.mxu0 0.0
          %1146 = vmatpush1.msra.mxu0 0.0
          %1147 = vmatprep.subr.mxu0 0.0
          %1148 = vmatpush1.msra.mxu0 0.0
          %1149 = vmatprep.subr.mxu0 0.0
          %1150 = vmatpush1.msra.mxu0 0.0
          %1151 = vmatprep.subr.mxu0 0.0
          %1152 = vmatpush1.msra.mxu0 0.0
          %1153 = vmatprep.subr.mxu0 0.0
          %1154 = vmatpush1.msra.mxu0 0.0
          %1155 = vmatprep.subr.mxu0 0.0
          %1156 = vmatpush1.msra.mxu0 0.0
          %1157 = vmatprep.subr.mxu0 0.0
          %1158 = vmatpush1.msra.mxu0 0.0
          %1159 = vmatprep.mubr.f32.mxu0 0.0
          %v1160 = vand.u32 %v790, 4294901760
          %1161 = vmatmul.mubr.f32.gmra.mrb[0].mxu0 %v1160
          %v1162 = vpop.f32.mrb[0].mxu0
          %v1163 = vadd.f32 %v1089, %v1162
          %v1164 = vpop.f32.mrb[0].mxu0
          %1165 = vdwg.mxu0
          %1166 = vmatprep.subr.mxu0 0.0
          %v1167 = vand.u32 %v788, 4294901760
          %1168 = vmatpush1.msra.mxu0 %v1167
          %1169 = vmatprep.subr.mxu0 0.0
          %1170 = vmatpush1.msra.mxu0 0.0
          %1171 = vmatprep.subr.mxu0 0.0
          %1172 = vmatpush1.msra.mxu0 0.0
          %1173 = vmatprep.subr.mxu0 0.0
          %1174 = vmatpush1.msra.mxu0 0.0
          %1175 = vmatprep.subr.mxu0 0.0
          %1176 = vmatpush1.msra.mxu0 0.0
          %1177 = vmatprep.subr.mxu0 0.0
          %1178 = vmatpush1.msra.mxu0 0.0
          %1179 = vmatprep.subr.mxu0 0.0
          %1180 = vmatpush1.msra.mxu0 0.0
          %1181 = vmatprep.subr.mxu0 0.0
          %1182 = vmatpush1.msra.mxu0 0.0
          %1183 = vmatprep.subr.mxu0 0.0
          %1184 = vmatpush1.msra.mxu0 0.0
          %1185 = vmatprep.subr.mxu0 0.0
          %1186 = vmatpush1.msra.mxu0 0.0
          %1187 = vmatprep.subr.mxu0 0.0
          %1188 = vmatpush1.msra.mxu0 0.0
          %1189 = vmatprep.subr.mxu0 0.0
          %1190 = vmatpush1.msra.mxu0 0.0
          %1191 = vmatprep.subr.mxu0 0.0
          %1192 = vmatpush1.msra.mxu0 0.0
          %1193 = vmatprep.subr.mxu0 0.0
          %1194 = vmatpush1.msra.mxu0 0.0
          %1195 = vmatprep.subr.mxu0 0.0
          %1196 = vmatpush1.msra.mxu0 0.0
          %1197 = vmatprep.subr.mxu0 0.0
          %1198 = vmatpush1.msra.mxu0 0.0
          %1199 = vmatprep.subr.mxu0 0.0
          %1200 = vmatpush1.msra.mxu0 0.0
          %1201 = vmatprep.subr.mxu0 0.0
          %1202 = vmatpush1.msra.mxu0 0.0
          %1203 = vmatprep.subr.mxu0 0.0
          %1204 = vmatpush1.msra.mxu0 0.0
          %1205 = vmatprep.subr.mxu0 0.0
          %1206 = vmatpush1.msra.mxu0 0.0
          %1207 = vmatprep.subr.mxu0 0.0
          %1208 = vmatpush1.msra.mxu0 0.0
          %1209 = vmatprep.subr.mxu0 0.0
          %1210 = vmatpush1.msra.mxu0 0.0
          %1211 = vmatprep.subr.mxu0 0.0
          %1212 = vmatpush1.msra.mxu0 0.0
          %1213 = vmatprep.subr.mxu0 0.0
          %1214 = vmatpush1.msra.mxu0 0.0
          %1215 = vmatprep.subr.mxu0 0.0
          %1216 = vmatpush1.msra.mxu0 0.0
          %1217 = vmatprep.subr.mxu0 0.0
          %1218 = vmatpush1.msra.mxu0 0.0
          %1219 = vmatprep.subr.mxu0 0.0
          %1220 = vmatpush1.msra.mxu0 0.0
          %1221 = vmatprep.subr.mxu0 0.0
          %1222 = vmatpush1.msra.mxu0 0.0
          %1223 = vmatprep.subr.mxu0 0.0
          %1224 = vmatpush1.msra.mxu0 0.0
          %1225 = vmatprep.subr.mxu0 0.0
          %1226 = vmatpush1.msra.mxu0 0.0
          %1227 = vmatprep.subr.mxu0 0.0
          %1228 = vmatpush1.msra.mxu0 0.0
          %1229 = vmatprep.subr.mxu0 0.0
          %1230 = vmatpush1.msra.mxu0 0.0
          %1231 = vmatprep.mubr.f32.mxu0 0.0
          %v1232 = vand.u32 %v790, 4294901760
          %1233 = vmatmul.mubr.f32.gmra.mrb[0].mxu0 %v1232
          %v1234 = vpop.f32.mrb[0].mxu0
          %v1235 = vadd.f32 %v1163, %v1234
          %v1236 = vpop.f32.mrb[0].mxu0
          %1237 = vdwg.mxu0
          %v1238 = vld [vmem:[%s309] sm:$0x1]
          %v1239 = vsel %vm771, %v1238, 0.0
          %1240 = vadd.xlane.f32.xlu0 %v1239
          %v1241 = vpop.xlane.xlu0 %1240
          %v1242 = vrcp.pop %v1241
          %v1243 = vmul.f32 %v1235, %v1242
          %v1244 = vsub.f32 %v787, %v1243
          %v1245 = vmax.f32 %v1244, 0.0
          %v1246 = vmul.f32 %v1245, %v1245
          %v1247 = vsel %vm780, %v1246, 0.0
          %1248 = vadd.xlane.f32.xlu0 %v1247
          %v1249 = vpop.xlane.xlu0 %1248
          %vm1250 = vcmask 0
          %1251 = vst.msk [vmem:[%s312] sm:$0x1] %vm1250, %v1249
        $region56: #{tpu_custom_call.1} parent=35 // pred_fallthru
          _
        %p1252 = scmp.lt.s32.totalorder %s25, 1
        %s1253 = scalar_select %p1252, %s25, 1
        %s1254 = scalar_lea.vmem %s4, %s1253
        // Predicated region
        $region57: #{tpu_custom_call.1} parent=35 // pred_check
          %p1255 = pneg %p159
        $region58: #{tpu_custom_call.1} parent=35 // pred_check_branch
          %1257 = sbr.rel (%p1255) target = $region60
        $region59: #{tpu_custom_call.1} parent=35 // pred_region
          _
        $region60: #{tpu_custom_call.1} parent=35 // pred_fallthru
          _
      $region36: #{tpu_custom_call.1} parent=5 // pred_fallthru
        _
      %p1258 = scmp.le.s32.totalorder 2, %s16
      // Predicated region
      $region61: #{tpu_custom_call.1} parent=5 // pred_check
        %p1259 = pneg %p1258
      $region62: #{tpu_custom_call.1} parent=5 // pred_check_branch
        %1261 = sbr.rel (%p1259) target = $region64
      $region63: #{tpu_custom_call.1} parent=5 // pred_region
        %s1262 = ssub.s32 %s16, 2
        // Predicated region
        $region65: #{tpu_custom_call.1} parent=63 // pred_check
          %p1263 = pneg %p165
        $region66: #{tpu_custom_call.1} parent=63 // pred_check_branch
          %1265 = sbr.rel (%p1263) target = $region68
        $region67: #{tpu_custom_call.1} parent=63 // pred_region
          %p1266 = scmp.lt.s32.totalorder %s27, 1
          %s1267 = scalar_select %p1266, %s27, 1
          %s1268 = scalar_lea.vmem %s4, %s1267
        $region68: #{tpu_custom_call.1} parent=63 // pred_fallthru
          _
      $region64: #{tpu_custom_call.1} parent=5 // pred_fallthru
        _
    $region6: #{tpu_custom_call.1} parent=1 // loop_footer
      %s20 = sadd.s32 1, %s16
    $region7: #{tpu_custom_call.1} parent=1 // loop_footer_branch
      %15 = sbr.rel target = $region3
    $region8: #{tpu_custom_call.1} parent=1 // loop_exit
      _
    %1269 = vsyncpa [#allocation4], 1
    %s1270 = scalar_lea.sflag [#allocation4], 1
    %1271 = vsyncpa %s1270, 1
    %1272 = vsyncpa [#allocation6], 1
    %s1273 = scalar_lea.sflag [#allocation6], 1
    %1274 = vsyncpa %s1273, 1

</llo_original>
